<compile_context>
chip_gen: v7x
topology: tpu7x:2x2x1
jax: 0.10.0
libtpu: 0.0.40
codegen_flags: <defaults>
</compile_context>

<pallas_src>
import functools

import jax
import jax.numpy as jnp
from jax.experimental import pallas as pl
from jax.experimental.pallas import tpu as pltpu


def _round_up(x, m):
    return (x + m - 1) // m * m


# ---------------------------------------------------------------------------
# Kernel 1: layer-1 aggregation over compacted nonzero A tiles, fused with
# bias + ReLU + the (h @ W2) projection in the k==last finalize.
#   acc    = sum_{k nonzero} A_hat[i, kidx[i,k]] @ XW1[kidx[i,k]]
#   h      = relu(acc + b1)
#   hw2[i] = h @ W2                      (feeds the layer-2 aggregation)
# ---------------------------------------------------------------------------
def _layer1_kernel(kidx_ref, kcnt_ref, a_ref, xw1_ref, b1_ref, w2_ref,
                   hw2_ref, acc_ref, *, tile_k):
    i = pl.program_id(0)
    k = pl.program_id(1)

    @pl.when(k == 0)
    def _():
        acc_ref[...] = jnp.zeros_like(acc_ref)

    # Skip compute on all-zero A_hat tiles (k >= nonzero-tile count).
    @pl.when(k < kcnt_ref[i])
    def _():
        kb = kidx_ref[i, k]
        off = pl.multiple_of(kb * tile_k, tile_k)
        acc_ref[...] += jnp.dot(a_ref[...], xw1_ref[pl.ds(off, tile_k), :],
                                preferred_element_type=jnp.float32)

    @pl.when(k == pl.num_programs(1) - 1)
    def _():
        h = jnp.maximum(acc_ref[...] + b1_ref[...], 0.0)          # bias+ReLU in f32
        hw2 = jnp.dot(h.astype(jnp.bfloat16), w2_ref[...],
                      preferred_element_type=jnp.float32)
        hw2_ref[...] = hw2.astype(hw2_ref.dtype)


# ---------------------------------------------------------------------------
# Kernel 2: layer-2 aggregation over compacted nonzero A tiles.
#   out[i] = sum_{k nonzero} A_hat[i, kidx[i,k]] @ HW2[kidx[i,k]] + b2
# ---------------------------------------------------------------------------
def _layer2_kernel(kidx_ref, kcnt_ref, a_ref, hw2_ref, b2_ref,
                   out_ref, acc_ref, *, tile_k):
    i = pl.program_id(0)
    k = pl.program_id(1)

    @pl.when(k == 0)
    def _():
        acc_ref[...] = jnp.zeros_like(acc_ref)

    @pl.when(k < kcnt_ref[i])
    def _():
        kb = kidx_ref[i, k]
        off = pl.multiple_of(kb * tile_k, tile_k)
        acc_ref[...] += jnp.dot(a_ref[...], hw2_ref[pl.ds(off, tile_k), :],
                                preferred_element_type=jnp.float32)

    @pl.when(k == pl.num_programs(1) - 1)
    def _():
        out_ref[...] = (acc_ref[...] + b2_ref[...]).astype(out_ref.dtype)


# ---------------------------------------------------------------------------
# Wrapper.
# ---------------------------------------------------------------------------
def gcn_forward(a_hat_pad, x, w1, b1, w2, b2, *, tile_m=512, tile_k=256):
    """a_hat_pad: (n_p, n_p) f32, already zero-padded; x: (n, fin) f32."""
    assert tile_m % tile_k == 0
    n_p = a_hat_pad.shape[0]
    assert n_p % tile_m == 0 and n_p % tile_k == 0
    n, _fin = x.shape
    hid = w1.shape[1]
    fout = w2.shape[1]
    h_p = _round_up(hid, 128)
    fout_p = _round_up(fout, 128)

    ni = n_p // tile_m
    nk = n_p // tile_k

    # --- zero-tile map (scalar prefetch): per row tile, the compacted list of
    # nonzero reduction-tile indices and its length.  Trailing entries repeat
    # the last valid index so the (unchanged) block index skips re-DMA.
    a4 = a_hat_pad.reshape(ni, tile_m, nk, tile_k)
    mask = jnp.any(a4 != 0, axis=(1, 3))                           # (ni, nk)
    kcnt = mask.sum(axis=1).astype(jnp.int32)                      # (ni,)
    order = jnp.argsort(jnp.where(mask, 0, 1), axis=1).astype(jnp.int32)
    last = jnp.take_along_axis(order, jnp.maximum(kcnt - 1, 0)[:, None], axis=1)
    last = jnp.where(kcnt > 0, last[:, 0], 0).astype(jnp.int32)
    kidx = jnp.where(jnp.arange(nk, dtype=jnp.int32)[None, :] < kcnt[:, None],
                     order, last[:, None]).astype(jnp.int32)

    a_bf = a_hat_pad.astype(jnp.bfloat16)

    # --- precompute XW1 (reassociation A @ (X @ W1)); lane-dense 128 pad, bf16
    xw1 = jnp.dot(x, w1, preferred_element_type=jnp.float32)
    xw1_p = jnp.zeros((n_p, h_p), jnp.bfloat16).at[:n, :hid].set(
        xw1.astype(jnp.bfloat16))
    b1_p = jnp.zeros((1, h_p), jnp.float32).at[:, :hid].set(b1.reshape(1, -1))
    w2_p = jnp.zeros((h_p, fout_p), jnp.bfloat16).at[:hid, :fout].set(
        w2.astype(jnp.bfloat16))
    b2_p = jnp.zeros((1, fout_p), jnp.float32).at[:, :fout].set(b2.reshape(1, -1))

    grid = (ni, nk)

    def _cparams(resident_bytes, out_bytes, acc_bytes):
        est = (2 * tile_m * tile_k * 2      # A tiles, double-buffered bf16
               + 2 * resident_bytes         # resident operands (worst case 2 bufs)
               + 2 * out_bytes              # output blocks
               + acc_bytes)                 # f32 accumulator scratch
        limit = int(min(64 * 2**20, max(32 * 2**20, int(est * 1.5))))
        return pltpu.CompilerParams(
            dimension_semantics=("parallel", "arbitrary"),
            vmem_limit_bytes=limit)

    # ---- layer 1: aggregation + bias + ReLU + (h @ W2) projection
    hw2 = pl.pallas_call(
        functools.partial(_layer1_kernel, tile_k=tile_k),
        out_shape=jax.ShapeDtypeStruct((n_p, fout_p), jnp.bfloat16),
        grid_spec=pltpu.PrefetchScalarGridSpec(
            num_scalar_prefetch=2,
            grid=grid,
            in_specs=[
                # A_hat tile, compacted reduction index
                pl.BlockSpec((tile_m, tile_k),
                             lambda i, k, kidx, kcnt: (i, kidx[i, k])),
                # XW1 fully VMEM-resident (DMA'd once)
                pl.BlockSpec((n_p, h_p), lambda i, k, kidx, kcnt: (0, 0)),
                pl.BlockSpec((1, h_p), lambda i, k, kidx, kcnt: (0, 0)),
                pl.BlockSpec((h_p, fout_p), lambda i, k, kidx, kcnt: (0, 0)),
            ],
            out_specs=pl.BlockSpec((tile_m, fout_p),
                                   lambda i, k, kidx, kcnt: (i, 0)),
            scratch_shapes=[pltpu.VMEM((tile_m, h_p), jnp.float32)],
        ),
        compiler_params=_cparams(n_p * h_p * 2 + h_p * fout_p * 2 + h_p * 4,
                                 tile_m * fout_p * 2,
                                 tile_m * h_p * 4),
    )(kidx, kcnt, a_bf, xw1_p, b1_p, w2_p)

    # ---- layer 2: out = A_hat @ HW2 + b2   (HW2 fully VMEM-resident)
    out_p = pl.pallas_call(
        functools.partial(_layer2_kernel, tile_k=tile_k),
        out_shape=jax.ShapeDtypeStruct((n_p, fout_p), jnp.float32),
        grid_spec=pltpu.PrefetchScalarGridSpec(
            num_scalar_prefetch=2,
            grid=grid,
            in_specs=[
                pl.BlockSpec((tile_m, tile_k),
                             lambda i, k, kidx, kcnt: (i, kidx[i, k])),
                pl.BlockSpec((n_p, fout_p), lambda i, k, kidx, kcnt: (0, 0)),
                pl.BlockSpec((1, fout_p), lambda i, k, kidx, kcnt: (0, 0)),
            ],
            out_specs=pl.BlockSpec((tile_m, fout_p),
                                   lambda i, k, kidx, kcnt: (i, 0)),
            scratch_shapes=[pltpu.VMEM((tile_m, fout_p), jnp.float32)],
        ),
        compiler_params=_cparams(n_p * fout_p * 2 + fout_p * 4,
                                 tile_m * fout_p * 4,
                                 tile_m * fout_p * 4),
    )(kidx, kcnt, a_bf, hw2, b2_p)

    return out_p[:n, :fout]


# ---------------------------------------------------------------------------
# Glue (plain JAX): densify edge_index into the GCN-normalized adjacency,
# built DIRECTLY at the padded size (no extra N^2 copy pass later).
# PyG semantics: add_remaining_self_loops (nodes that already have a self-loop
# keep it; the rest get weight-1 loops), then symmetric normalization.
# ---------------------------------------------------------------------------
def build_normalized_adjacency(edge_index, num_nodes, num_nodes_padded):
    src = edge_index[0]
    dst = edge_index[1]
    a = jnp.zeros((num_nodes_padded, num_nodes_padded), jnp.float32)
    a = a.at[dst, src].add(1.0)
    idx = jnp.arange(num_nodes)
    diag = a[idx, idx]
    a = a.at[idx, idx].set(jnp.where(diag > 0, diag, 1.0))  # add_remaining_self_loops
    deg = a.sum(axis=1)                                      # padded rows: deg 0
    dinv = jnp.where(deg > 0, jax.lax.rsqrt(deg), 0.0)
    return dinv[:, None] * a * dinv[None, :]


# ---------------------------------------------------------------------------
# References.
# ---------------------------------------------------------------------------
def gcn_ref_f32(a_hat, x, w1, b1, w2, b2):
    h = jnp.maximum(a_hat @ (x @ w1) + b1.reshape(1, -1), 0.0)
    return a_hat @ (h @ w2) + b2.reshape(1, -1)


def gcn_ref_matched(a_hat, x, w1, b1, w2, b2):
    """Same bf16 input casts as the kernel (f32 accumulation)."""
    a = a_hat.astype(jnp.bfloat16)
    xw1 = jnp.dot(x, w1).astype(jnp.bfloat16)
    agg = jnp.dot(a, xw1, preferred_element_type=jnp.float32)
    h = jnp.maximum(agg + b1.reshape(1, -1), 0.0)
    hw2 = jnp.dot(h.astype(jnp.bfloat16), w2.astype(jnp.bfloat16),
                  preferred_element_type=jnp.float32).astype(jnp.bfloat16)
    return jnp.dot(a, hw2, preferred_element_type=jnp.float32) + b2.reshape(1, -1)


if __name__ == "__main__":
    # Small deterministic problem consistent with the module:
    #   num_nodes=16, input_dim=8, hidden_dim=32, output_dim=4, num_edges=32
    num_nodes, input_dim, hidden_dim, output_dim, num_edges = 16, 8, 32, 4, 32
    tile_m, tile_k = 512, 256
    n_p = _round_up(num_nodes, tile_m)   # tile_m % tile_k == 0 -> both divide n_p

    key = jax.random.PRNGKey(0)
    kx, ke1, ke2, kw1, kw2, kb1, kb2 = jax.random.split(key, 7)

    x = jax.random.normal(kx, (num_nodes, input_dim), jnp.float32)
    edge_index = jnp.stack(
        [
            jax.random.randint(ke1, (num_edges,), 0, num_nodes, dtype=jnp.int32),
            jax.random.randint(ke2, (num_edges,), 0, num_nodes, dtype=jnp.int32),
        ],
        axis=0,
    )  # [2, E]

    # Glorot-like GCNConv weights; small random biases so the bias path is live.
    s1 = jnp.sqrt(6.0 / (input_dim + hidden_dim))
    s2 = jnp.sqrt(6.0 / (hidden_dim + output_dim))
    w1 = jax.random.uniform(kw1, (input_dim, hidden_dim), jnp.float32, -s1, s1)
    b1 = 0.1 * jax.random.normal(kb1, (hidden_dim,), jnp.float32)
    w2 = jax.random.uniform(kw2, (hidden_dim, output_dim), jnp.float32, -s2, s2)
    b2 = 0.1 * jax.random.normal(kb2, (output_dim,), jnp.float32)

    a_hat_pad = build_normalized_adjacency(edge_index, num_nodes, n_p)

    out = gcn_forward(a_hat_pad, x, w1, b1, w2, b2, tile_m=tile_m, tile_k=tile_k)
    out = jax.block_until_ready(out)
    assert out.shape == (num_nodes, output_dim)

    a_hat = a_hat_pad[:num_nodes, :num_nodes]
    ref_m = gcn_ref_matched(a_hat, x, w1, b1, w2, b2)
    ref_f = gcn_ref_f32(a_hat, x, w1, b1, w2, b2)
    assert jnp.allclose(out, ref_m, atol=2e-3, rtol=2e-3), "mismatch vs matched-cast ref"
    assert jnp.allclose(out, ref_f, atol=5e-2, rtol=5e-2), "mismatch vs f32 ref"

    print("KERNEL_OK")
</pallas_src>

<mosaic_0001>
module attributes {stable_mosaic.version = 11 : i64} {
  func.func @_layer1_kernel(%arg0: i32, %arg1: i32, %arg2: memref<1x2xi32, #tpu.memory_space<smem>>, %arg3: memref<1xi32, #tpu.memory_space<smem>>, %arg4: memref<512x256xbf16, #tpu.memory_space<vmem>>, %arg5: memref<512x128xbf16, #tpu.memory_space<vmem>>, %arg6: memref<1x128xf32, #tpu.memory_space<vmem>>, %arg7: memref<128x128xbf16, #tpu.memory_space<vmem>>, %arg8: memref<512x128xbf16, #tpu.memory_space<vmem>>, %arg9: memref<512x128xf32, #tpu.memory_space<vmem>>) attributes {dimension_semantics = [#tpu.dimension_semantics<parallel>, #tpu.dimension_semantics<arbitrary>], iteration_bounds = array<i64: 1, 2>, scalar_prefetch = 2 : i64, scratch_operands = 1 : i64, tpu.core_type = #tpu.core_type<tc>, window_params = [{transform_indices = @transform_0, window_bounds = array<i64: 512, 256>}, {pipeline_mode = #tpu.pipeline_mode<synchronous>, transform_indices = @transform_1, window_bounds = array<i64: 512, 128>}, {pipeline_mode = #tpu.pipeline_mode<synchronous>, transform_indices = @transform_2, window_bounds = array<i64: 1, 128>}, {pipeline_mode = #tpu.pipeline_mode<synchronous>, transform_indices = @transform_3, window_bounds = array<i64: 128, 128>}, {transform_indices = @transform_4, window_bounds = array<i64: 512, 128>}]} {
    %c0_i32 = arith.constant 0 : i32
    %0 = arith.cmpi eq, %arg1, %c0_i32 : i32
    %1 = arith.extui %0 : i1 to i32
    %c0_i32_0 = arith.constant 0 : i32
    %2 = arith.cmpi ne, %1, %c0_i32_0 : i32
    scf.if %2 {
      %cst = arith.constant 0.000000e+00 : f32
      %11 = vector.broadcast %cst : f32 to vector<512x128xf32>
      %c0 = arith.constant 0 : index
      %c0_3 = arith.constant 0 : index
      %12 = vector.load %arg9[%c0, %c0_3] : memref<512x128xf32, #tpu.memory_space<vmem>>, vector<512x128xf32>
      tpu.vector_store %arg9[%c0, %c0_3], %11 {strides = array<i32>} : memref<512x128xf32, #tpu.memory_space<vmem>>, vector<512x128xf32>,
    } else {
    }
    %3 = arith.index_cast %arg0 : i32 to index
    %4 = memref.load %arg3[%3] : memref<1xi32, #tpu.memory_space<smem>>
    %5 = arith.cmpi slt, %arg1, %4 : i32
    %6 = arith.extui %5 : i1 to i32
    %c0_i32_1 = arith.constant 0 : i32
    %7 = arith.cmpi ne, %6, %c0_i32_1 : i32
    scf.if %7 {
      %11 = arith.index_cast %arg0 : i32 to index
      %12 = arith.index_cast %arg1 : i32 to index
      %13 = memref.load %arg2[%11, %12] : memref<1x2xi32, #tpu.memory_space<smem>>
      %c256_i32 = arith.constant 256 : i32
      %14 = arith.muli %13, %c256_i32 : i32
      %15 = tpu.assume_multiple %14, 256 : i32
      %c0 = arith.constant 0 : index
      %c0_3 = arith.constant 0 : index
      %16 = vector.load %arg9[%c0, %c0_3] : memref<512x128xf32, #tpu.memory_space<vmem>>, vector<512x128xf32>
      %c0_4 = arith.constant 0 : index
      %c0_5 = arith.constant 0 : index
      %17 = vector.load %arg4[%c0_4, %c0_5] : memref<512x256xbf16, #tpu.memory_space<vmem>>, vector<512x256xbf16>
      %18 = arith.index_cast %15 : i32 to index
      %c0_6 = arith.constant 0 : index
      %19 = vector.load %arg5[%18, %c0_6] : memref<512x128xbf16, #tpu.memory_space<vmem>>, vector<256x128xbf16>
      %cst = arith.constant dense<0.000000e+00> : vector<512x128xf32>
      %20 = tpu.matmul %17, %19, %cst {dimension_numbers = #tpu.dot_dimension_numbers<[1], [0], [0], [1], [0, 0, 1, 1], [], []>} : vector<512x256xbf16>, vector<256x128xbf16>, vector<512x128xf32> -> vector<512x128xf32>
      %21 = arith.addf %16, %20 : vector<512x128xf32>
      %c0_7 = arith.constant 0 : index
      %c0_8 = arith.constant 0 : index
      %22 = vector.load %arg9[%c0_7, %c0_8] : memref<512x128xf32, #tpu.memory_space<vmem>>, vector<512x128xf32>
      tpu.vector_store %arg9[%c0_7, %c0_8], %21 {strides = array<i32>} : memref<512x128xf32, #tpu.memory_space<vmem>>, vector<512x128xf32>,
    } else {
    }
    %c1_i32 = arith.constant 1 : i32
    %8 = arith.cmpi eq, %arg1, %c1_i32 : i32
    %9 = arith.extui %8 : i1 to i32
    %c0_i32_2 = arith.constant 0 : i32
    %10 = arith.cmpi ne, %9, %c0_i32_2 : i32
    scf.if %10 {
      %c0 = arith.constant 0 : index
      %c0_3 = arith.constant 0 : index
      %11 = vector.load %arg9[%c0, %c0_3] : memref<512x128xf32, #tpu.memory_space<vmem>>, vector<512x128xf32>
      %c0_4 = arith.constant 0 : index
      %c0_5 = arith.constant 0 : index
      %12 = vector.load %arg6[%c0_4, %c0_5] : memref<1x128xf32, #tpu.memory_space<vmem>>, vector<1x128xf32>
      %13 = vector.broadcast %12 : vector<1x128xf32> to vector<512x128xf32>
      %14 = arith.addf %11, %13 : vector<512x128xf32>
      %cst = arith.constant 0.000000e+00 : f32
      %15 = vector.broadcast %cst : f32 to vector<512x128xf32>
      %16 = arith.maximumf %14, %15 : vector<512x128xf32>
      %17 = arith.truncf %16 : vector<512x128xf32> to vector<512x128xbf16>
      %c0_6 = arith.constant 0 : index
      %c0_7 = arith.constant 0 : index
      %18 = vector.load %arg7[%c0_6, %c0_7] : memref<128x128xbf16, #tpu.memory_space<vmem>>, vector<128x128xbf16>
      %cst_8 = arith.constant dense<0.000000e+00> : vector<512x128xf32>
      %19 = tpu.matmul %17, %18, %cst_8 {dimension_numbers = #tpu.dot_dimension_numbers<[1], [0], [0], [1], [0, 0, 1, 1], [], []>} : vector<512x128xbf16>, vector<128x128xbf16>, vector<512x128xf32> -> vector<512x128xf32>
      %20 = arith.truncf %19 : vector<512x128xf32> to vector<512x128xbf16>
      %c0_9 = arith.constant 0 : index
      %c0_10 = arith.constant 0 : index
      %21 = vector.load %arg8[%c0_9, %c0_10] : memref<512x128xbf16, #tpu.memory_space<vmem>>, vector<512x128xbf16>
      tpu.vector_store %arg8[%c0_9, %c0_10], %20 {strides = array<i32>} : memref<512x128xbf16, #tpu.memory_space<vmem>>, vector<512x128xbf16>,
    } else {
    }
    return
  }
  func.func @transform_0(%arg0: i32, %arg1: i32, %arg2: memref<1x2xi32, #tpu.memory_space<smem>>, %arg3: memref<1xi32, #tpu.memory_space<smem>>) -> (i32, i32) {
    %0 = arith.index_cast %arg0 : i32 to index
    %1 = arith.index_cast %arg1 : i32 to index
    %2 = memref.load %arg2[%0, %1] : memref<1x2xi32, #tpu.memory_space<smem>>
    %c0_i32 = arith.constant 0 : i32
    return %arg0, %2 : i32, i32
  }
  func.func @transform_1(%arg0: i32, %arg1: i32, %arg2: memref<1x2xi32, #tpu.memory_space<smem>>, %arg3: memref<1xi32, #tpu.memory_space<smem>>) -> (i32, i32) {
    %c0_i32 = arith.constant 0 : i32
    %c0_i32_0 = arith.constant 0 : i32
    %c0_i32_1 = arith.constant 0 : i32
    return %c0_i32, %c0_i32_0 : i32, i32
  }
  func.func @transform_2(%arg0: i32, %arg1: i32, %arg2: memref<1x2xi32, #tpu.memory_space<smem>>, %arg3: memref<1xi32, #tpu.memory_space<smem>>) -> (i32, i32) {
    %c0_i32 = arith.constant 0 : i32
    %c0_i32_0 = arith.constant 0 : i32
    %c0_i32_1 = arith.constant 0 : i32
    return %c0_i32, %c0_i32_0 : i32, i32
  }
  func.func @transform_3(%arg0: i32, %arg1: i32, %arg2: memref<1x2xi32, #tpu.memory_space<smem>>, %arg3: memref<1xi32, #tpu.memory_space<smem>>) -> (i32, i32) {
    %c0_i32 = arith.constant 0 : i32
    %c0_i32_0 = arith.constant 0 : i32
    %c0_i32_1 = arith.constant 0 : i32
    return %c0_i32, %c0_i32_0 : i32, i32
  }
  func.func @transform_4(%arg0: i32, %arg1: i32, %arg2: memref<1x2xi32, #tpu.memory_space<smem>>, %arg3: memref<1xi32, #tpu.memory_space<smem>>) -> (i32, i32) {
    %c0_i32 = arith.constant 0 : i32
    %c0_i32_0 = arith.constant 0 : i32
    return %arg0, %c0_i32 : i32, i32
  }
}

</mosaic_0001>

<llo_original>
// kernel: tpu_custom_call.1
$region0: #{tpu_custom_call.1}
  #allocation0 [shape = 'u32[]', space=smem, size = 0x4, offset = 0x4, fixed_abs, tag = 'smem constant byte address 0x4 - core index']
  #allocation1 [shape = 'u32[144,128]{1,0:T(1,128)}', space=vmem, size = 0x12000, scoped, tag = 'internal scratch']
  #allocation2 [shape = 'f32[512,128]{1,0:T(8,128)}', space=vmem, size = 0x40000, scoped, tag = 'scratch operand']
  #allocation3 [shape = 's32[1]{0}', space=sflag, size = 0x4, scoped, tag = 'scoped memory for tpu_custom_call.1']
  #allocation4 [shape = 'u8[512]{0}', space=smem, size = 0x200, scoped, tag = 'prefetched SMEM operand 0']
  #allocation5 [shape = 's32[1]{0:T(128)S(6)}', space=smem, size = 0x200, scoped, tag = 'prefetched SMEM operand 1']
  %s0 = inlined_call_operand.vmem [shape: s32[1,2], index: 0, kind: input, shape index: {}]
  %s1 = inlined_call_operand.<no memory space> [shape: s32[1], index: 1, kind: input, shape index: {}]
  %s2 = inlined_call_operand.hbm [shape: bf16[512,512], index: 2, kind: input, shape index: {}]
  %s3 = inlined_call_operand.hbm [shape: bf16[512,128], index: 3, kind: input, shape index: {}]
  %s4 = inlined_call_operand.vmem [shape: f32[1,128], index: 4, kind: input, shape index: {}]
  %s5 = inlined_call_operand.hbm [shape: bf16[128,128], index: 5, kind: input, shape index: {}]
  %s6 = inlined_call_operand.hbm [shape: bf16[512,128], index: 6, kind: output, shape index: {}]
  %s7 = sld [smem:[#allocation0]]
  $region73: #{tpu_custom_call.1} parent=0
    _
  %s9 = ssub.s32 1, %s7
  %s10 = scalar_select 0, %s9, %s7
  %s11 = sshll.u32 %s0, 4
  %s12 = int_to_ptr.vmem [resolvable:$true] %s11
  %14 = dma.vmem_to_smem %s12, 16, [#allocation4], [#allocation3]
  %15 = sst [smem:[#allocation5]] %s1
  %16 = dma.done [#allocation3], 16
  %17 = sfence
  $region1: #{tpu_custom_call.1} parent=0
    #allocation6 [shape = 'u8[524288]{0}', space=vmem, size = 0x80000, scoped, tag = 'input window, operand 2']
    #allocation7 [shape = 's32[2]{0}', space=sflag, size = 0x8, scoped, tag = 'scoped memory for tpu_custom_call.1']
    #allocation8 [shape = 's32[2]{0}', space=sflag, size = 0x8, scoped, tag = 'scoped memory for tpu_custom_call.1']
    #allocation9 [shape = 'u8[131072]{0}', space=vmem, size = 0x20000, scoped, tag = 'input window, operand 3, single buffered']
    #allocation10 [shape = 's32[1]{0}', space=sflag, size = 0x4, scoped, tag = 'scoped memory for tpu_custom_call.1']
    #allocation11 [shape = 'u8[32768]{0}', space=vmem, size = 0x8000, scoped, tag = 'input window, operand 5, single buffered']
    #allocation12 [shape = 'u8[131072]{0}', space=vmem, size = 0x20000, scoped, tag = 'output window, operand 0, single buffered']
    %18 = vsyncpa [#allocation7], 0
    %s19 = scalar_lea.sflag [#allocation7], 1
    %20 = vsyncpa %s19, 0
    %21 = vsyncpa [#allocation10], 0
    %22 = vsyncpa [#allocation8], 0
    loop: start=0, step=1, limit=4
    $region2: #{tpu_custom_call.1} parent=1 // loop_pre_header
      _
    $region3: #{tpu_custom_call.1} parent=1 // loop_header
      %s24 = sphi 0, %s28
      %p25 = scmp.ge.s32.totalorder %s24, 4
      %s31 = sphi 0, %s43
      %s32 = sphi 0, %s39
      %s33 = sphi 0, %s31
      %s34 = sphi 0, %s32
      %s35 = sphi 0, %s33
      %s36 = sphi 0, %s34
      %s64 = sphi 0, %s66
      %s67 = sphi 0, %s64
      %s68 = sphi 0, %s67
      %s84 = sphi 0, %s68
      %s88 = sphi 0, %s88
      %s90 = sphi 0, %s88
      %s91 = sphi 0, %s90
      %s105 = sphi 0, %s91
      %s109 = sphi 0, %s109
      %s111 = sphi 0, %s109
      %s112 = sphi 0, %s111
      %s126 = sphi 0, %s112
      %s130 = sphi 0, %s130
      %s132 = sphi 0, %s130
      %s133 = sphi 0, %s132
      %s147 = sphi 0, %s133
      %s153 = sphi 0, %s155
      %s156 = sphi 0, %s153
      %s157 = sphi 0, %s156
      %s173 = sphi 0, %s157
    $region4: #{tpu_custom_call.1} parent=1 // loop_header_branch
      %27 = sbr.rel (%p25) target = $region8
    $region5: #{tpu_custom_call.1} parent=1 // loop_body
      %s29 = ssub.s32 %s24, 1
      %s30 = ssub.s32 %s24, 2
      %s37 = sadd.s32 1, %s32
      %p38 = scmp.ge.s32.totalorder %s37, 2
      %s39 = scalar_select %p38, 0, %s37
      %s40 = sadd.s32 1, %s31
      %s41 = scalar_select %p38, %s40, %s31
      %p42 = scmp.ge.s32.totalorder %s41, 1
      %s43 = scalar_select %p42, 0, %s41
      %s44 = sshra.s32 %s32, 7
      %s45 = sand.u32 %s32, 127
      %s46 = sadd.s32 %s44, %s31
      %s47 = smul.u32 %s46, 128
      %s48 = sshra.s32 %s32, 7
      %s49 = sand.u32 %s32, 127
      %s50 = sadd.s32 %s47, %s49
      %s51 = sld [smem:[#allocation4 + %s50]]
      %s52 = sshra.s32 %s39, 7
      %s53 = sand.u32 %s39, 127
      %s54 = sadd.s32 %s52, %s43
      %s55 = smul.u32 %s54, 128
      %s56 = sshra.s32 %s39, 7
      %s57 = sand.u32 %s39, 127
      %s58 = sadd.s32 %s55, %s57
      %s59 = sld [smem:[#allocation4 + %s58]]
      %s60 = ssub.s32 %s31, %s43
      %s61 = ssub.s32 %s51, %s59
      %s62 = sor.u32 %s60, %s61
      %p63 = scmp.eq.s32.totalorder %s62, 0
      %s65 = sadd.s32 %s64, 1
      %s66 = scalar_select %p63, %s64, %s65
      %p69 = pneg %p63
      %p70 = scmp.eq.s32.totalorder %s24, 1
      %p71 = por %p69, %p70
      %p72 = scmp.ne.s32.totalorder %s64, %s67
      %p73 = scmp.eq.s32.totalorder %s24, 0
      %p74 = por %p72, %p73
      %p75 = scmp.ne.s32.totalorder %s64, %s67
      %p76 = scmp.eq.s32.totalorder %s29, 1
      %p77 = por %p75, %p76
      %p78 = scmp.ne.s32.totalorder %s67, %s68
      %p79 = scmp.eq.s32.totalorder %s29, 0
      %p80 = por %p78, %p79
      %p81 = scmp.ne.s32.totalorder %s67, %s68
      %p82 = scmp.eq.s32.totalorder %s30, 1
      %p83 = por %p81, %p82
      %p85 = scmp.ne.s32.totalorder %s68, %s84
      %p86 = scmp.eq.s32.totalorder %s30, 0
      %p87 = por %p85, %p86
      %s89 = sadd.s32 %s88, 1
      %p92 = scmp.eq.s32.totalorder %s24, 1
      %p93 = scmp.ne.s32.totalorder %s88, %s90
      %p94 = scmp.eq.s32.totalorder %s24, 0
      %p95 = por %p93, %p94
      %p96 = scmp.ne.s32.totalorder %s88, %s90
      %p97 = scmp.eq.s32.totalorder %s29, 1
      %p98 = por %p96, %p97
      %p99 = scmp.ne.s32.totalorder %s90, %s91
      %p100 = scmp.eq.s32.totalorder %s29, 0
      %p101 = por %p99, %p100
      %p102 = scmp.ne.s32.totalorder %s90, %s91
      %p103 = scmp.eq.s32.totalorder %s30, 1
      %p104 = por %p102, %p103
      %p106 = scmp.ne.s32.totalorder %s91, %s105
      %p107 = scmp.eq.s32.totalorder %s30, 0
      %p108 = por %p106, %p107
      %s110 = sadd.s32 %s109, 1
      %p113 = scmp.eq.s32.totalorder %s24, 1
      %p114 = scmp.ne.s32.totalorder %s109, %s111
      %p115 = scmp.eq.s32.totalorder %s24, 0
      %p116 = por %p114, %p115
      %p117 = scmp.ne.s32.totalorder %s109, %s111
      %p118 = scmp.eq.s32.totalorder %s29, 1
      %p119 = por %p117, %p118
      %p120 = scmp.ne.s32.totalorder %s111, %s112
      %p121 = scmp.eq.s32.totalorder %s29, 0
      %p122 = por %p120, %p121
      %p123 = scmp.ne.s32.totalorder %s111, %s112
      %p124 = scmp.eq.s32.totalorder %s30, 1
      %p125 = por %p123, %p124
      %p127 = scmp.ne.s32.totalorder %s112, %s126
      %p128 = scmp.eq.s32.totalorder %s30, 0
      %p129 = por %p127, %p128
      %s131 = sadd.s32 %s130, 1
      %p134 = scmp.eq.s32.totalorder %s24, 1
      %p135 = scmp.ne.s32.totalorder %s130, %s132
      %p136 = scmp.eq.s32.totalorder %s24, 0
      %p137 = por %p135, %p136
      %p138 = scmp.ne.s32.totalorder %s130, %s132
      %p139 = scmp.eq.s32.totalorder %s29, 1
      %p140 = por %p138, %p139
      %p141 = scmp.ne.s32.totalorder %s132, %s133
      %p142 = scmp.eq.s32.totalorder %s29, 0
      %p143 = por %p141, %p142
      %p144 = scmp.ne.s32.totalorder %s132, %s133
      %p145 = scmp.eq.s32.totalorder %s30, 1
      %p146 = por %p144, %p145
      %p148 = scmp.ne.s32.totalorder %s133, %s147
      %p149 = scmp.eq.s32.totalorder %s30, 0
      %p150 = por %p148, %p149
      %s151 = ssub.s32 %s31, %s43
      %p152 = scmp.eq.s32.totalorder %s151, 0
      %s154 = sadd.s32 %s153, 1
      %s155 = scalar_select %p152, %s153, %s154
      %p158 = pneg %p152
      %p159 = scmp.eq.s32.totalorder %s24, 1
      %p160 = por %p158, %p159
      %p161 = scmp.ne.s32.totalorder %s153, %s156
      %p162 = scmp.eq.s32.totalorder %s24, 0
      %p163 = por %p161, %p162
      %p164 = scmp.ne.s32.totalorder %s153, %s156
      %p165 = scmp.eq.s32.totalorder %s29, 1
      %p166 = por %p164, %p165
      %p167 = scmp.ne.s32.totalorder %s156, %s157
      %p168 = scmp.eq.s32.totalorder %s29, 0
      %p169 = por %p167, %p168
      %p170 = scmp.ne.s32.totalorder %s156, %s157
      %p171 = scmp.eq.s32.totalorder %s30, 1
      %p172 = por %p170, %p171
      %p174 = scmp.ne.s32.totalorder %s157, %s173
      %p175 = scmp.eq.s32.totalorder %s30, 0
      %p176 = por %p174, %p175
      %p177 = scmp.le.s32.totalorder 1, %s24
      %p178 = scmp.lt.s32.totalorder %s24, 3
      %p179 = pnand %p177, %p178
      %p180 = pneg %p179
      // Predicated region
      $region9: #{tpu_custom_call.1} parent=5 // pred_check
        _
      $region10: #{tpu_custom_call.1} parent=5 // pred_check_branch
        %182 = sbr.rel (%p179) target = $region12
      $region11: #{tpu_custom_call.1} parent=5 // pred_region
        %s183 = ssub.s32 %s24, 1
        // Predicated region
        $region13: #{tpu_custom_call.1} parent=11 // pred_check
          %p184 = pneg %p101
        $region14: #{tpu_custom_call.1} parent=11 // pred_check_branch
          %186 = sbr.rel (%p184) target = $region16
        $region15: #{tpu_custom_call.1} parent=11 // pred_region
          %s188 = ssub.s32 4096, 4096
          %189 = vsyncadd [#allocation10], %s188
          %s190 = sshll.u32 [#allocation9], 4
          %s191 = int_to_ptr.vmem [resolvable:$true] %s190
          %196 = dma.hbm_to_vmem [thread:$0]  %s3, 4096, %s191, [#allocation10], 64, 64, 4
        $region16: #{tpu_custom_call.1} parent=11 // pred_fallthru
          _
        // Predicated region
        $region17: #{tpu_custom_call.1} parent=11 // pred_check
          %p197 = pneg %p122
        $region18: #{tpu_custom_call.1} parent=11 // pred_check_branch
          %199 = sbr.rel (%p197) target = $region20
        $region19: #{tpu_custom_call.1} parent=11 // pred_region
          _
        $region20: #{tpu_custom_call.1} parent=11 // pred_fallthru
          _
        // Predicated region
        $region21: #{tpu_custom_call.1} parent=11 // pred_check
          %p200 = pneg %p143
        $region22: #{tpu_custom_call.1} parent=11 // pred_check_branch
          %202 = sbr.rel (%p200) target = $region24
        $region23: #{tpu_custom_call.1} parent=11 // pred_region
          %s204 = ssub.s32 1024, 1024
          %205 = vsyncadd [#allocation10], %s204
          %s206 = sshll.u32 [#allocation11], 4
          %s207 = int_to_ptr.vmem [resolvable:$true] %s206
          %212 = dma.hbm_to_vmem [thread:$0]  %s5, 1024, %s207, [#allocation10], 64, 64, 4
        $region24: #{tpu_custom_call.1} parent=11 // pred_fallthru
          _
      $region12: #{tpu_custom_call.1} parent=5 // pred_fallthru
        _
      %p213 = scmp.lt.s32.totalorder %s24, 2
      // Predicated region
      $region25: #{tpu_custom_call.1} parent=5 // pred_check
        %p214 = pneg %p213
      $region26: #{tpu_custom_call.1} parent=5 // pred_check_branch
        %216 = sbr.rel (%p214) target = $region28
      $region27: #{tpu_custom_call.1} parent=5 // pred_region
        // Predicated region
        $region29: #{tpu_custom_call.1} parent=27 // pred_check
          %p217 = pneg %p74
        $region30: #{tpu_custom_call.1} parent=27 // pred_check_branch
          %219 = sbr.rel (%p217) target = $region32
        $region31: #{tpu_custom_call.1} parent=27 // pred_region
          %s220 = sand.u32 %s64, 1
          %s221 = scalar_lea.sflag [#allocation7], %s220
          %s222 = sand.u32 %s64, 1
          %s223 = smul.addr %s222, 512
          %s224 = scalar_lea.vmem [#allocation6], %s223
          %s225 = sshra.s32 %s32, 7
          %s226 = sand.u32 %s32, 127
          %s227 = sadd.s32 %s225, %s31
          %s228 = smul.u32 %s227, 128
          %s229 = sshra.s32 %s32, 7
          %s230 = sand.u32 %s32, 127
          %s231 = sadd.s32 %s228, %s230
          %s232 = sld [smem:[#allocation4 + %s231]]
          %s233 = smul.u32 64, %s31
          %s234 = smul.u32 2, %s232
          %s236 = ssub.s32 8192, 8192
          %237 = vsyncadd %s221, %s236
          %s238 = smul.addr %s233, 4
          %s239 = sadd.s32 %s234, %s238
          %s240 = smul.addr %s239, 64
          %s241 = scalar_lea.hbm %s2, %s240
          %s242 = sshll.u32 %s224, 4
          %s243 = int_to_ptr.vmem [resolvable:$true] %s242
          %248 = dma.hbm_to_vmem [thread:$0]  %s241, 8192, %s243, %s221, 256, 128, 8
        $region32: #{tpu_custom_call.1} parent=27 // pred_fallthru
          _
      $region28: #{tpu_custom_call.1} parent=5 // pred_fallthru
        _
      %p249 = scmp.le.s32.totalorder 1, %s24
      %p250 = scmp.lt.s32.totalorder %s24, 3
      %p251 = pnand %p249, %p250
      %p252 = pneg %p251
      // Predicated region
      $region33: #{tpu_custom_call.1} parent=5 // pred_check
        _
      $region34: #{tpu_custom_call.1} parent=5 // pred_check_branch
        %254 = sbr.rel (%p251) target = $region36
      $region35: #{tpu_custom_call.1} parent=5 // pred_region
        %s255 = ssub.s32 %s24, 1
        %s256 = sand.u32 %s67, 1
        %s257 = scalar_lea.sflag [#allocation7], %s256
        %s258 = sand.u32 %s67, 1
        %s259 = smul.addr %s258, 512
        %s260 = scalar_lea.vmem [#allocation6], %s259
        // Predicated region
        $region37: #{tpu_custom_call.1} parent=35 // pred_check
          %p261 = pneg %p80
        $region38: #{tpu_custom_call.1} parent=35 // pred_check_branch
          %263 = sbr.rel (%p261) target = $region40
        $region39: #{tpu_custom_call.1} parent=35 // pred_region
          %264 = dma.done %s257, 8192
        $region40: #{tpu_custom_call.1} parent=35 // pred_fallthru
          _
        // Predicated region
        $region41: #{tpu_custom_call.1} parent=35 // pred_check
          %p265 = pneg %p101
        $region42: #{tpu_custom_call.1} parent=35 // pred_check_branch
          %267 = sbr.rel (%p265) target = $region44
        $region43: #{tpu_custom_call.1} parent=35 // pred_region
          %268 = dma.done [#allocation10], 4096
        $region44: #{tpu_custom_call.1} parent=35 // pred_fallthru
          _
        // Predicated region
        $region45: #{tpu_custom_call.1} parent=35 // pred_check
          %p269 = pneg %p143
        $region46: #{tpu_custom_call.1} parent=35 // pred_check_branch
          %271 = sbr.rel (%p269) target = $region48
        $region47: #{tpu_custom_call.1} parent=35 // pred_region
          %272 = dma.done [#allocation10], 1024
        $region48: #{tpu_custom_call.1} parent=35 // pred_fallthru
          _
        %s273 = sand.u32 %s67, 1
        %s274 = scalar_lea.sflag [#allocation7], %s273
        %s275 = sand.u32 %s67, 1
        %s276 = smul.addr %s275, 512
        %s277 = scalar_lea.vmem [#allocation6], %s276
        %p278 = pneg %p80
        %p279 = pneg %p77
        %p280 = pneg %p101
        %p281 = pneg %p98
        %p282 = pneg %p122
        %p283 = pneg %p119
        %p284 = pneg %p143
        %p285 = pneg %p140
        %p286 = pneg %p169
        %p287 = pneg %p166
        %s288 = sshra.s32 %s34, 7
        %s289 = sand.u32 %s34, 127
        %s290 = sadd.s32 %s288, %s33
        %s291 = smul.u32 %s290, 128
        %s292 = sshra.s32 %s34, 7
        %s293 = sand.u32 %s34, 127
        %s294 = sadd.s32 %s291, %s293
        %s295 = sld [smem:[#allocation4 + %s294]]
        %s296 = smul.u32 64, %s33
        %s297 = smul.u32 2, %s295
        %s298 = smul.u32 64, %s33
        %p300 = scmp.eq.s32.totalorder %s34, 0
        // Predicated region
        $region49: #{tpu_custom_call.1} parent=35 // pred_check
          %p301 = pneg %p300
        $region50: #{tpu_custom_call.1} parent=35 // pred_check_branch
          %303 = sbr.rel (%p301) target = $region52
        $region51: #{tpu_custom_call.1} parent=35 // pred_region
          %304 = vst [vmem:[#allocation2] sm:$0xff] 0.0
          %305 = vst [vmem:[#allocation2 + $0x8] sm:$0xff] 0.0
          %306 = vst [vmem:[#allocation2 + $0x10] sm:$0xff] 0.0
          %307 = vst [vmem:[#allocation2 + $0x18] sm:$0xff] 0.0
          %308 = vst [vmem:[#allocation2 + $0x20] sm:$0xff] 0.0
          %309 = vst [vmem:[#allocation2 + $0x28] sm:$0xff] 0.0
          %310 = vst [vmem:[#allocation2 + $0x30] sm:$0xff] 0.0
          %311 = vst [vmem:[#allocation2 + $0x38] sm:$0xff] 0.0
          %312 = vst [vmem:[#allocation2 + $0x40] sm:$0xff] 0.0
          %313 = vst [vmem:[#allocation2 + $0x48] sm:$0xff] 0.0
          %314 = vst [vmem:[#allocation2 + $0x50] sm:$0xff] 0.0
          %315 = vst [vmem:[#allocation2 + $0x58] sm:$0xff] 0.0
          %316 = vst [vmem:[#allocation2 + $0x60] sm:$0xff] 0.0
          %317 = vst [vmem:[#allocation2 + $0x68] sm:$0xff] 0.0
          %318 = vst [vmem:[#allocation2 + $0x70] sm:$0xff] 0.0
          %319 = vst [vmem:[#allocation2 + $0x78] sm:$0xff] 0.0
          %320 = vst [vmem:[#allocation2 + $0x80] sm:$0xff] 0.0
          %321 = vst [vmem:[#allocation2 + $0x88] sm:$0xff] 0.0
          %322 = vst [vmem:[#allocation2 + $0x90] sm:$0xff] 0.0
          %323 = vst [vmem:[#allocation2 + $0x98] sm:$0xff] 0.0
          %324 = vst [vmem:[#allocation2 + $0xa0] sm:$0xff] 0.0
          %325 = vst [vmem:[#allocation2 + $0xa8] sm:$0xff] 0.0
          %326 = vst [vmem:[#allocation2 + $0xb0] sm:$0xff] 0.0
          %327 = vst [vmem:[#allocation2 + $0xb8] sm:$0xff] 0.0
          %328 = vst [vmem:[#allocation2 + $0xc0] sm:$0xff] 0.0
          %329 = vst [vmem:[#allocation2 + $0xc8] sm:$0xff] 0.0
          %330 = vst [vmem:[#allocation2 + $0xd0] sm:$0xff] 0.0
          %331 = vst [vmem:[#allocation2 + $0xd8] sm:$0xff] 0.0
          %332 = vst [vmem:[#allocation2 + $0xe0] sm:$0xff] 0.0
          %333 = vst [vmem:[#allocation2 + $0xe8] sm:$0xff] 0.0
          %334 = vst [vmem:[#allocation2 + $0xf0] sm:$0xff] 0.0
          %335 = vst [vmem:[#allocation2 + $0xf8] sm:$0xff] 0.0
          %336 = vst [vmem:[#allocation2 + $0x100] sm:$0xff] 0.0
          %337 = vst [vmem:[#allocation2 + $0x108] sm:$0xff] 0.0
          %338 = vst [vmem:[#allocation2 + $0x110] sm:$0xff] 0.0
          %339 = vst [vmem:[#allocation2 + $0x118] sm:$0xff] 0.0
          %340 = vst [vmem:[#allocation2 + $0x120] sm:$0xff] 0.0
          %341 = vst [vmem:[#allocation2 + $0x128] sm:$0xff] 0.0
          %342 = vst [vmem:[#allocation2 + $0x130] sm:$0xff] 0.0
          %343 = vst [vmem:[#allocation2 + $0x138] sm:$0xff] 0.0
          %344 = vst [vmem:[#allocation2 + $0x140] sm:$0xff] 0.0
          %345 = vst [vmem:[#allocation2 + $0x148] sm:$0xff] 0.0
          %346 = vst [vmem:[#allocation2 + $0x150] sm:$0xff] 0.0
          %347 = vst [vmem:[#allocation2 + $0x158] sm:$0xff] 0.0
          %348 = vst [vmem:[#allocation2 + $0x160] sm:$0xff] 0.0
          %349 = vst [vmem:[#allocation2 + $0x168] sm:$0xff] 0.0
          %350 = vst [vmem:[#allocation2 + $0x170] sm:$0xff] 0.0
          %351 = vst [vmem:[#allocation2 + $0x178] sm:$0xff] 0.0
          %352 = vst [vmem:[#allocation2 + $0x180] sm:$0xff] 0.0
          %353 = vst [vmem:[#allocation2 + $0x188] sm:$0xff] 0.0
          %354 = vst [vmem:[#allocation2 + $0x190] sm:$0xff] 0.0
          %355 = vst [vmem:[#allocation2 + $0x198] sm:$0xff] 0.0
          %356 = vst [vmem:[#allocation2 + $0x1a0] sm:$0xff] 0.0
          %357 = vst [vmem:[#allocation2 + $0x1a8] sm:$0xff] 0.0
          %358 = vst [vmem:[#allocation2 + $0x1b0] sm:$0xff] 0.0
          %359 = vst [vmem:[#allocation2 + $0x1b8] sm:$0xff] 0.0
          %360 = vst [vmem:[#allocation2 + $0x1c0] sm:$0xff] 0.0
          %361 = vst [vmem:[#allocation2 + $0x1c8] sm:$0xff] 0.0
          %362 = vst [vmem:[#allocation2 + $0x1d0] sm:$0xff] 0.0
          %363 = vst [vmem:[#allocation2 + $0x1d8] sm:$0xff] 0.0
          %364 = vst [vmem:[#allocation2 + $0x1e0] sm:$0xff] 0.0
          %365 = vst [vmem:[#allocation2 + $0x1e8] sm:$0xff] 0.0
          %366 = vst [vmem:[#allocation2 + $0x1f0] sm:$0xff] 0.0
          %367 = vst [vmem:[#allocation2 + $0x1f8] sm:$0xff] 0.0
        $region52: #{tpu_custom_call.1} parent=35 // pred_fallthru
          _
        %s368 = sld [smem:[#allocation5 + %s33]]
        %p369 = scmp.lt.s32.totalorder %s34, %s368
        // Predicated region
        $region53: #{tpu_custom_call.1} parent=35 // pred_check
          %p370 = pneg %p369
        $region54: #{tpu_custom_call.1} parent=35 // pred_check_branch
          %372 = sbr.rel (%p370) target = $region56
        $region55: #{tpu_custom_call.1} parent=35 // pred_region
          %s373 = sshra.s32 %s34, 7
          %s374 = sand.u32 %s34, 127
          %s375 = sadd.s32 %s373, %s33
          %s376 = smul.u32 %s375, 128
          %s377 = sshra.s32 %s34, 7
          %s378 = sand.u32 %s34, 127
          %s379 = sadd.s32 %s376, %s378
          %s380 = sld [smem:[#allocation4 + %s379]]
          %s381 = smul.u32 %s380, 256
          %v382 = vld [vmem:[#allocation2] sm:$0xff]
          %v383 = vld [vmem:[#allocation2 + $0x8] sm:$0xff]
          %v384 = vld [vmem:[#allocation2 + $0x10] sm:$0xff]
          %v385 = vld [vmem:[#allocation2 + $0x18] sm:$0xff]
          %v386 = vld [vmem:[#allocation2 + $0x20] sm:$0xff]
          %v387 = vld [vmem:[#allocation2 + $0x28] sm:$0xff]
          %v388 = vld [vmem:[#allocation2 + $0x30] sm:$0xff]
          %v389 = vld [vmem:[#allocation2 + $0x38] sm:$0xff]
          %v390 = vld [vmem:[#allocation2 + $0x40] sm:$0xff]
          %v391 = vld [vmem:[#allocation2 + $0x48] sm:$0xff]
          %v392 = vld [vmem:[#allocation2 + $0x50] sm:$0xff]
          %v393 = vld [vmem:[#allocation2 + $0x58] sm:$0xff]
          %v394 = vld [vmem:[#allocation2 + $0x60] sm:$0xff]
          %v395 = vld [vmem:[#allocation2 + $0x68] sm:$0xff]
          %v396 = vld [vmem:[#allocation2 + $0x70] sm:$0xff]
          %v397 = vld [vmem:[#allocation2 + $0x78] sm:$0xff]
          %v398 = vld [vmem:[#allocation2 + $0x80] sm:$0xff]
          %v399 = vld [vmem:[#allocation2 + $0x88] sm:$0xff]
          %v400 = vld [vmem:[#allocation2 + $0x90] sm:$0xff]
          %v401 = vld [vmem:[#allocation2 + $0x98] sm:$0xff]
          %v402 = vld [vmem:[#allocation2 + $0xa0] sm:$0xff]
          %v403 = vld [vmem:[#allocation2 + $0xa8] sm:$0xff]
          %v404 = vld [vmem:[#allocation2 + $0xb0] sm:$0xff]
          %v405 = vld [vmem:[#allocation2 + $0xb8] sm:$0xff]
          %v406 = vld [vmem:[#allocation2 + $0xc0] sm:$0xff]
          %v407 = vld [vmem:[#allocation2 + $0xc8] sm:$0xff]
          %v408 = vld [vmem:[#allocation2 + $0xd0] sm:$0xff]
          %v409 = vld [vmem:[#allocation2 + $0xd8] sm:$0xff]
          %v410 = vld [vmem:[#allocation2 + $0xe0] sm:$0xff]
          %v411 = vld [vmem:[#allocation2 + $0xe8] sm:$0xff]
          %v412 = vld [vmem:[#allocation2 + $0xf0] sm:$0xff]
          %v413 = vld [vmem:[#allocation2 + $0xf8] sm:$0xff]
          %v414 = vld [vmem:[#allocation2 + $0x100] sm:$0xff]
          %v415 = vld [vmem:[#allocation2 + $0x108] sm:$0xff]
          %v416 = vld [vmem:[#allocation2 + $0x110] sm:$0xff]
          %v417 = vld [vmem:[#allocation2 + $0x118] sm:$0xff]
          %v418 = vld [vmem:[#allocation2 + $0x120] sm:$0xff]
          %v419 = vld [vmem:[#allocation2 + $0x128] sm:$0xff]
          %v420 = vld [vmem:[#allocation2 + $0x130] sm:$0xff]
          %v421 = vld [vmem:[#allocation2 + $0x138] sm:$0xff]
          %v422 = vld [vmem:[#allocation2 + $0x140] sm:$0xff]
          %v423 = vld [vmem:[#allocation2 + $0x148] sm:$0xff]
          %v424 = vld [vmem:[#allocation2 + $0x150] sm:$0xff]
          %v425 = vld [vmem:[#allocation2 + $0x158] sm:$0xff]
          %v426 = vld [vmem:[#allocation2 + $0x160] sm:$0xff]
          %v427 = vld [vmem:[#allocation2 + $0x168] sm:$0xff]
          %v428 = vld [vmem:[#allocation2 + $0x170] sm:$0xff]
          %v429 = vld [vmem:[#allocation2 + $0x178] sm:$0xff]
          %v430 = vld [vmem:[#allocation2 + $0x180] sm:$0xff]
          %v431 = vld [vmem:[#allocation2 + $0x188] sm:$0xff]
          %v432 = vld [vmem:[#allocation2 + $0x190] sm:$0xff]
          %v433 = vld [vmem:[#allocation2 + $0x198] sm:$0xff]
          %v434 = vld [vmem:[#allocation2 + $0x1a0] sm:$0xff]
          %v435 = vld [vmem:[#allocation2 + $0x1a8] sm:$0xff]
          %v436 = vld [vmem:[#allocation2 + $0x1b0] sm:$0xff]
          %v437 = vld [vmem:[#allocation2 + $0x1b8] sm:$0xff]
          %v438 = vld [vmem:[#allocation2 + $0x1c0] sm:$0xff]
          %v439 = vld [vmem:[#allocation2 + $0x1c8] sm:$0xff]
          %v440 = vld [vmem:[#allocation2 + $0x1d0] sm:$0xff]
          %v441 = vld [vmem:[#allocation2 + $0x1d8] sm:$0xff]
          %v442 = vld [vmem:[#allocation2 + $0x1e0] sm:$0xff]
          %v443 = vld [vmem:[#allocation2 + $0x1e8] sm:$0xff]
          %v444 = vld [vmem:[#allocation2 + $0x1f0] sm:$0xff]
          %v445 = vld [vmem:[#allocation2 + $0x1f8] sm:$0xff]
          %v446 = vld [vmem:[%s260] sm:$0xff]
          %v447 = vld [vmem:[%s260 + $0x8] sm:$0xff]
          %v448 = vld [vmem:[%s260 + $0x10] sm:$0xff]
          %v449 = vld [vmem:[%s260 + $0x18] sm:$0xff]
          %v450 = vld [vmem:[%s260 + $0x20] sm:$0xff]
          %v451 = vld [vmem:[%s260 + $0x28] sm:$0xff]
          %v452 = vld [vmem:[%s260 + $0x30] sm:$0xff]
          %v453 = vld [vmem:[%s260 + $0x38] sm:$0xff]
          %v454 = vld [vmem:[%s260 + $0x40] sm:$0xff]
          %v455 = vld [vmem:[%s260 + $0x48] sm:$0xff]
          %v456 = vld [vmem:[%s260 + $0x50] sm:$0xff]
          %v457 = vld [vmem:[%s260 + $0x58] sm:$0xff]
          %v458 = vld [vmem:[%s260 + $0x60] sm:$0xff]
          %v459 = vld [vmem:[%s260 + $0x68] sm:$0xff]
          %v460 = vld [vmem:[%s260 + $0x70] sm:$0xff]
          %v461 = vld [vmem:[%s260 + $0x78] sm:$0xff]
          %v462 = vld [vmem:[%s260 + $0x80] sm:$0xff]
          %v463 = vld [vmem:[%s260 + $0x88] sm:$0xff]
          %v464 = vld [vmem:[%s260 + $0x90] sm:$0xff]
          %v465 = vld [vmem:[%s260 + $0x98] sm:$0xff]
          %v466 = vld [vmem:[%s260 + $0xa0] sm:$0xff]
          %v467 = vld [vmem:[%s260 + $0xa8] sm:$0xff]
          %v468 = vld [vmem:[%s260 + $0xb0] sm:$0xff]
          %v469 = vld [vmem:[%s260 + $0xb8] sm:$0xff]
          %v470 = vld [vmem:[%s260 + $0xc0] sm:$0xff]
          %v471 = vld [vmem:[%s260 + $0xc8] sm:$0xff]
          %v472 = vld [vmem:[%s260 + $0xd0] sm:$0xff]
          %v473 = vld [vmem:[%s260 + $0xd8] sm:$0xff]
          %v474 = vld [vmem:[%s260 + $0xe0] sm:$0xff]
          %v475 = vld [vmem:[%s260 + $0xe8] sm:$0xff]
          %v476 = vld [vmem:[%s260 + $0xf0] sm:$0xff]
          %v477 = vld [vmem:[%s260 + $0xf8] sm:$0xff]
          %v478 = vld [vmem:[%s260 + $0x100] sm:$0xff]
          %v479 = vld [vmem:[%s260 + $0x108] sm:$0xff]
          %v480 = vld [vmem:[%s260 + $0x110] sm:$0xff]
          %v481 = vld [vmem:[%s260 + $0x118] sm:$0xff]
          %v482 = vld [vmem:[%s260 + $0x120] sm:$0xff]
          %v483 = vld [vmem:[%s260 + $0x128] sm:$0xff]
          %v484 = vld [vmem:[%s260 + $0x130] sm:$0xff]
          %v485 = vld [vmem:[%s260 + $0x138] sm:$0xff]
          %v486 = vld [vmem:[%s260 + $0x140] sm:$0xff]
          %v487 = vld [vmem:[%s260 + $0x148] sm:$0xff]
          %v488 = vld [vmem:[%s260 + $0x150] sm:$0xff]
          %v489 = vld [vmem:[%s260 + $0x158] sm:$0xff]
          %v490 = vld [vmem:[%s260 + $0x160] sm:$0xff]
          %v491 = vld [vmem:[%s260 + $0x168] sm:$0xff]
          %v492 = vld [vmem:[%s260 + $0x170] sm:$0xff]
          %v493 = vld [vmem:[%s260 + $0x178] sm:$0xff]
          %v494 = vld [vmem:[%s260 + $0x180] sm:$0xff]
          %v495 = vld [vmem:[%s260 + $0x188] sm:$0xff]
          %v496 = vld [vmem:[%s260 + $0x190] sm:$0xff]
          %v497 = vld [vmem:[%s260 + $0x198] sm:$0xff]
          %v498 = vld [vmem:[%s260 + $0x1a0] sm:$0xff]
          %v499 = vld [vmem:[%s260 + $0x1a8] sm:$0xff]
          %v500 = vld [vmem:[%s260 + $0x1b0] sm:$0xff]
          %v501 = vld [vmem:[%s260 + $0x1b8] sm:$0xff]
          %v502 = vld [vmem:[%s260 + $0x1c0] sm:$0xff]
          %v503 = vld [vmem:[%s260 + $0x1c8] sm:$0xff]
          %v504 = vld [vmem:[%s260 + $0x1d0] sm:$0xff]
          %v505 = vld [vmem:[%s260 + $0x1d8] sm:$0xff]
          %v506 = vld [vmem:[%s260 + $0x1e0] sm:$0xff]
          %v507 = vld [vmem:[%s260 + $0x1e8] sm:$0xff]
          %v508 = vld [vmem:[%s260 + $0x1f0] sm:$0xff]
          %v509 = vld [vmem:[%s260 + $0x1f8] sm:$0xff]
          %s510 = sshra.s32 %s381, 3
          %s511 = sand.u32 %s381, 7
          %s512 = smul.addr %s510, 4
          %s513 = scalar_lea.vmem [#allocation9], %s512
          %v514 = vld [vmem:[%s513] sm:$0xf]
          %v515 = vld [vmem:[%s513 + $0x4] sm:$0xf]
          %v516 = vld [vmem:[%s513 + $0x8] sm:$0xf]
          %v517 = vld [vmem:[%s513 + $0xc] sm:$0xf]
          %v518 = vld [vmem:[%s513 + $0x10] sm:$0xf]
          %v519 = vld [vmem:[%s513 + $0x14] sm:$0xf]
          %v520 = vld [vmem:[%s513 + $0x18] sm:$0xf]
          %v521 = vld [vmem:[%s513 + $0x1c] sm:$0xf]
          %v522 = vld [vmem:[%s513 + $0x20] sm:$0xf]
          %v523 = vld [vmem:[%s513 + $0x24] sm:$0xf]
          %v524 = vld [vmem:[%s513 + $0x28] sm:$0xf]
          %v525 = vld [vmem:[%s513 + $0x2c] sm:$0xf]
          %v526 = vld [vmem:[%s513 + $0x30] sm:$0xf]
          %v527 = vld [vmem:[%s513 + $0x34] sm:$0xf]
          %v528 = vld [vmem:[%s513 + $0x38] sm:$0xf]
          %v529 = vld [vmem:[%s513 + $0x3c] sm:$0xf]
          %v530 = vld [vmem:[%s513 + $0x40] sm:$0xf]
          %v531 = vld [vmem:[%s513 + $0x44] sm:$0xf]
          %v532 = vld [vmem:[%s513 + $0x48] sm:$0xf]
          %v533 = vld [vmem:[%s513 + $0x4c] sm:$0xf]
          %v534 = vld [vmem:[%s513 + $0x50] sm:$0xf]
          %v535 = vld [vmem:[%s513 + $0x54] sm:$0xf]
          %v536 = vld [vmem:[%s513 + $0x58] sm:$0xf]
          %v537 = vld [vmem:[%s513 + $0x5c] sm:$0xf]
          %v538 = vld [vmem:[%s513 + $0x60] sm:$0xf]
          %v539 = vld [vmem:[%s513 + $0x64] sm:$0xf]
          %v540 = vld [vmem:[%s513 + $0x68] sm:$0xf]
          %v541 = vld [vmem:[%s513 + $0x6c] sm:$0xf]
          %v542 = vld [vmem:[%s513 + $0x70] sm:$0xf]
          %v543 = vld [vmem:[%s513 + $0x74] sm:$0xf]
          %v544 = vld [vmem:[%s513 + $0x78] sm:$0xf]
          %v545 = vld [vmem:[%s513 + $0x7c] sm:$0xf]
          %v610 = vunpack.c.l.b16 %v446
          %v611 = vunpack.c.h.b16 %v446
          %v612 = vunpack.c.l.b16 %v447
          %v613 = vunpack.c.h.b16 %v447
          %v614 = vunpack.c.l.b16 %v448
          %v615 = vunpack.c.h.b16 %v448
          %v616 = vunpack.c.l.b16 %v449
          %v617 = vunpack.c.h.b16 %v449
          %v618 = vunpack.c.l.b16 %v450
          %v619 = vunpack.c.h.b16 %v450
          %v620 = vunpack.c.l.b16 %v451
          %v621 = vunpack.c.h.b16 %v451
          %v622 = vunpack.c.l.b16 %v452
          %v623 = vunpack.c.h.b16 %v452
          %v624 = vunpack.c.l.b16 %v453
          %v625 = vunpack.c.h.b16 %v453
          %v626 = vunpack.c.l.b16 %v454
          %v627 = vunpack.c.h.b16 %v454
          %v628 = vunpack.c.l.b16 %v455
          %v629 = vunpack.c.h.b16 %v455
          %v630 = vunpack.c.l.b16 %v456
          %v631 = vunpack.c.h.b16 %v456
          %v632 = vunpack.c.l.b16 %v457
          %v633 = vunpack.c.h.b16 %v457
          %v634 = vunpack.c.l.b16 %v458
          %v635 = vunpack.c.h.b16 %v458
          %v636 = vunpack.c.l.b16 %v459
          %v637 = vunpack.c.h.b16 %v459
          %v638 = vunpack.c.l.b16 %v460
          %v639 = vunpack.c.h.b16 %v460
          %v640 = vunpack.c.l.b16 %v461
          %v641 = vunpack.c.h.b16 %v461
          %v642 = vunpack.c.l.b16 %v462
          %v643 = vunpack.c.h.b16 %v462
          %v644 = vunpack.c.l.b16 %v463
          %v645 = vunpack.c.h.b16 %v463
          %v646 = vunpack.c.l.b16 %v464
          %v647 = vunpack.c.h.b16 %v464
          %v648 = vunpack.c.l.b16 %v465
          %v649 = vunpack.c.h.b16 %v465
          %v650 = vunpack.c.l.b16 %v466
          %v651 = vunpack.c.h.b16 %v466
          %v652 = vunpack.c.l.b16 %v467
          %v653 = vunpack.c.h.b16 %v467
          %v654 = vunpack.c.l.b16 %v468
          %v655 = vunpack.c.h.b16 %v468
          %v656 = vunpack.c.l.b16 %v469
          %v657 = vunpack.c.h.b16 %v469
          %v658 = vunpack.c.l.b16 %v470
          %v659 = vunpack.c.h.b16 %v470
          %v660 = vunpack.c.l.b16 %v471
          %v661 = vunpack.c.h.b16 %v471
          %v662 = vunpack.c.l.b16 %v472
          %v663 = vunpack.c.h.b16 %v472
          %v664 = vunpack.c.l.b16 %v473
          %v665 = vunpack.c.h.b16 %v473
          %v666 = vunpack.c.l.b16 %v474
          %v667 = vunpack.c.h.b16 %v474
          %v668 = vunpack.c.l.b16 %v475
          %v669 = vunpack.c.h.b16 %v475
          %v670 = vunpack.c.l.b16 %v476
          %v671 = vunpack.c.h.b16 %v476
          %v672 = vunpack.c.l.b16 %v477
          %v673 = vunpack.c.h.b16 %v477
          %v674 = vunpack.c.l.b16 %v478
          %v675 = vunpack.c.h.b16 %v478
          %v676 = vunpack.c.l.b16 %v479
          %v677 = vunpack.c.h.b16 %v479
          %v678 = vunpack.c.l.b16 %v480
          %v679 = vunpack.c.h.b16 %v480
          %v680 = vunpack.c.l.b16 %v481
          %v681 = vunpack.c.h.b16 %v481
          %v682 = vunpack.c.l.b16 %v482
          %v683 = vunpack.c.h.b16 %v482
          %v684 = vunpack.c.l.b16 %v483
          %v685 = vunpack.c.h.b16 %v483
          %v686 = vunpack.c.l.b16 %v484
          %v687 = vunpack.c.h.b16 %v484
          %v688 = vunpack.c.l.b16 %v485
          %v689 = vunpack.c.h.b16 %v485
          %v690 = vunpack.c.l.b16 %v486
          %v691 = vunpack.c.h.b16 %v486
          %v692 = vunpack.c.l.b16 %v487
          %v693 = vunpack.c.h.b16 %v487
          %v694 = vunpack.c.l.b16 %v488
          %v695 = vunpack.c.h.b16 %v488
          %v696 = vunpack.c.l.b16 %v489
          %v697 = vunpack.c.h.b16 %v489
          %v698 = vunpack.c.l.b16 %v490
          %v699 = vunpack.c.h.b16 %v490
          %v700 = vunpack.c.l.b16 %v491
          %v701 = vunpack.c.h.b16 %v491
          %v702 = vunpack.c.l.b16 %v492
          %v703 = vunpack.c.h.b16 %v492
          %v704 = vunpack.c.l.b16 %v493
          %v705 = vunpack.c.h.b16 %v493
          %v706 = vunpack.c.l.b16 %v494
          %v707 = vunpack.c.h.b16 %v494
          %v708 = vunpack.c.l.b16 %v495
          %v709 = vunpack.c.h.b16 %v495
          %v710 = vunpack.c.l.b16 %v496
          %v711 = vunpack.c.h.b16 %v496
          %v712 = vunpack.c.l.b16 %v497
          %v713 = vunpack.c.h.b16 %v497
          %v714 = vunpack.c.l.b16 %v498
          %v715 = vunpack.c.h.b16 %v498
          %v716 = vunpack.c.l.b16 %v499
          %v717 = vunpack.c.h.b16 %v499
          %v718 = vunpack.c.l.b16 %v500
          %v719 = vunpack.c.h.b16 %v500
          %v720 = vunpack.c.l.b16 %v501
          %v721 = vunpack.c.h.b16 %v501
          %v722 = vunpack.c.l.b16 %v502
          %v723 = vunpack.c.h.b16 %v502
          %v724 = vunpack.c.l.b16 %v503
          %v725 = vunpack.c.h.b16 %v503
          %v726 = vunpack.c.l.b16 %v504
          %v727 = vunpack.c.h.b16 %v504
          %v728 = vunpack.c.l.b16 %v505
          %v729 = vunpack.c.h.b16 %v505
          %v730 = vunpack.c.l.b16 %v506
          %v731 = vunpack.c.h.b16 %v506
          %v732 = vunpack.c.l.b16 %v507
          %v733 = vunpack.c.h.b16 %v507
          %v734 = vunpack.c.l.b16 %v508
          %v735 = vunpack.c.h.b16 %v508
          %v736 = vunpack.c.l.b16 %v509
          %v737 = vunpack.c.h.b16 %v509
          %v738 = vpack.c.b16 %v612, %v610
          %v739 = vpack.c.b16 %v613, %v611
          %v740 = vpack.c.b16 %v616, %v614
          %v741 = vpack.c.b16 %v617, %v615
          %v742 = vpack.c.b16 %v620, %v618
          %v743 = vpack.c.b16 %v621, %v619
          %v744 = vpack.c.b16 %v624, %v622
          %v745 = vpack.c.b16 %v625, %v623
          %v746 = vpack.c.b16 %v628, %v626
          %v747 = vpack.c.b16 %v629, %v627
          %v748 = vpack.c.b16 %v632, %v630
          %v749 = vpack.c.b16 %v633, %v631
          %v750 = vpack.c.b16 %v636, %v634
          %v751 = vpack.c.b16 %v637, %v635
          %v752 = vpack.c.b16 %v640, %v638
          %v753 = vpack.c.b16 %v641, %v639
          %v754 = vpack.c.b16 %v644, %v642
          %v755 = vpack.c.b16 %v645, %v643
          %v756 = vpack.c.b16 %v648, %v646
          %v757 = vpack.c.b16 %v649, %v647
          %v758 = vpack.c.b16 %v652, %v650
          %v759 = vpack.c.b16 %v653, %v651
          %v760 = vpack.c.b16 %v656, %v654
          %v761 = vpack.c.b16 %v657, %v655
          %v762 = vpack.c.b16 %v660, %v658
          %v763 = vpack.c.b16 %v661, %v659
          %v764 = vpack.c.b16 %v664, %v662
          %v765 = vpack.c.b16 %v665, %v663
          %v766 = vpack.c.b16 %v668, %v666
          %v767 = vpack.c.b16 %v669, %v667
          %v768 = vpack.c.b16 %v672, %v670
          %v769 = vpack.c.b16 %v673, %v671
          %v770 = vpack.c.b16 %v676, %v674
          %v771 = vpack.c.b16 %v677, %v675
          %v772 = vpack.c.b16 %v680, %v678
          %v773 = vpack.c.b16 %v681, %v679
          %v774 = vpack.c.b16 %v684, %v682
          %v775 = vpack.c.b16 %v685, %v683
          %v776 = vpack.c.b16 %v688, %v686
          %v777 = vpack.c.b16 %v689, %v687
          %v778 = vpack.c.b16 %v692, %v690
          %v779 = vpack.c.b16 %v693, %v691
          %v780 = vpack.c.b16 %v696, %v694
          %v781 = vpack.c.b16 %v697, %v695
          %v782 = vpack.c.b16 %v700, %v698
          %v783 = vpack.c.b16 %v701, %v699
          %v784 = vpack.c.b16 %v704, %v702
          %v785 = vpack.c.b16 %v705, %v703
          %v786 = vpack.c.b16 %v708, %v706
          %v787 = vpack.c.b16 %v709, %v707
          %v788 = vpack.c.b16 %v712, %v710
          %v789 = vpack.c.b16 %v713, %v711
          %v790 = vpack.c.b16 %v716, %v714
          %v791 = vpack.c.b16 %v717, %v715
          %v792 = vpack.c.b16 %v720, %v718
          %v793 = vpack.c.b16 %v721, %v719
          %v794 = vpack.c.b16 %v724, %v722
          %v795 = vpack.c.b16 %v725, %v723
          %v796 = vpack.c.b16 %v728, %v726
          %v797 = vpack.c.b16 %v729, %v727
          %v798 = vpack.c.b16 %v732, %v730
          %v799 = vpack.c.b16 %v733, %v731
          %v800 = vpack.c.b16 %v736, %v734
          %v801 = vpack.c.b16 %v737, %v735
          %v898 = vunpack.c.l.b16 %v514
          %v899 = vunpack.c.l.b16 %v515
          %v900 = vunpack.c.l.b16 %v516
          %v901 = vunpack.c.l.b16 %v517
          %v902 = vunpack.c.l.b16 %v518
          %v903 = vunpack.c.l.b16 %v519
          %v904 = vunpack.c.l.b16 %v520
          %v905 = vunpack.c.l.b16 %v521
          %v906 = vunpack.c.l.b16 %v522
          %v907 = vunpack.c.l.b16 %v523
          %v908 = vunpack.c.l.b16 %v524
          %v909 = vunpack.c.l.b16 %v525
          %v910 = vunpack.c.l.b16 %v526
          %v911 = vunpack.c.l.b16 %v527
          %v912 = vunpack.c.l.b16 %v528
          %v913 = vunpack.c.l.b16 %v529
          %v914 = vunpack.c.l.b16 %v530
          %v915 = vunpack.c.l.b16 %v531
          %v916 = vunpack.c.l.b16 %v532
          %v917 = vunpack.c.l.b16 %v533
          %v918 = vunpack.c.l.b16 %v534
          %v919 = vunpack.c.l.b16 %v535
          %v920 = vunpack.c.l.b16 %v536
          %v921 = vunpack.c.l.b16 %v537
          %v922 = vunpack.c.l.b16 %v538
          %v923 = vunpack.c.l.b16 %v539
          %v924 = vunpack.c.l.b16 %v540
          %v925 = vunpack.c.l.b16 %v541
          %v926 = vunpack.c.l.b16 %v542
          %v927 = vunpack.c.l.b16 %v543
          %v928 = vunpack.c.l.b16 %v544
          %v929 = vunpack.c.l.b16 %v545
          %v930 = vpack.c.b16 %v899, %v898
          %v931 = vpack.c.b16 %v901, %v900
          %v932 = vpack.c.b16 %v903, %v902
          %v933 = vpack.c.b16 %v905, %v904
          %v934 = vpack.c.b16 %v907, %v906
          %v935 = vpack.c.b16 %v909, %v908
          %v936 = vpack.c.b16 %v911, %v910
          %v937 = vpack.c.b16 %v913, %v912
          %v938 = vpack.c.b16 %v915, %v914
          %v939 = vpack.c.b16 %v917, %v916
          %v940 = vpack.c.b16 %v919, %v918
          %v941 = vpack.c.b16 %v921, %v920
          %v942 = vpack.c.b16 %v923, %v922
          %v943 = vpack.c.b16 %v925, %v924
          %v944 = vpack.c.b16 %v927, %v926
          %v945 = vpack.c.b16 %v929, %v928
          %962 = vmatprep.subr.bf16.mxu0 0
          %963 = vmatpush1.bf16.msra.mxu0 %v930
          %964 = vmatprep.subr.bf16.mxu0 0
          %965 = vmatpush1.bf16.msra.mxu0 %v931
          %966 = vmatprep.subr.bf16.mxu0 0
          %967 = vmatpush1.bf16.msra.mxu0 %v932
          %968 = vmatprep.subr.bf16.mxu0 0
          %969 = vmatpush1.bf16.msra.mxu0 %v933
          %970 = vmatprep.subr.bf16.mxu0 0
          %971 = vmatpush1.bf16.msra.mxu0 %v934
          %972 = vmatprep.subr.bf16.mxu0 0
          %973 = vmatpush1.bf16.msra.mxu0 %v935
          %974 = vmatprep.subr.bf16.mxu0 0
          %975 = vmatpush1.bf16.msra.mxu0 %v936
          %976 = vmatprep.subr.bf16.mxu0 0
          %977 = vmatpush1.bf16.msra.mxu0 %v937
          %978 = vmatprep.subr.bf16.mxu0 0
          %979 = vmatpush1.bf16.msra.mxu0 %v938
          %980 = vmatprep.subr.bf16.mxu0 0
          %981 = vmatpush1.bf16.msra.mxu0 %v939
          %982 = vmatprep.subr.bf16.mxu0 0
          %983 = vmatpush1.bf16.msra.mxu0 %v940
          %984 = vmatprep.subr.bf16.mxu0 0
          %985 = vmatpush1.bf16.msra.mxu0 %v941
          %986 = vmatprep.subr.bf16.mxu0 0
          %987 = vmatpush1.bf16.msra.mxu0 %v942
          %988 = vmatprep.subr.bf16.mxu0 0
          %989 = vmatpush1.bf16.msra.mxu0 %v943
          %990 = vmatprep.subr.bf16.mxu0 0
          %991 = vmatpush1.bf16.msra.mxu0 %v944
          %992 = vmatprep.subr.bf16.mxu0 0
          %993 = vmatpush1.bf16.msra.mxu0 %v945
          %994 = vmatprep.mubr.bf16.mxu0 %v739
          %995 = vmatmul.mubr.bf16.gmra.mrb[0].mxu0 %v738
          %v996 = vpop.f32.mrb[0].mxu0
          %v997 = vadd.f32 0.0, %v996
          %v998 = vpop.f32.mrb[0].mxu0
          %v999 = vpop.f32.mrb[0].mxu0
          %v1000 = vadd.f32 0.0, %v999
          %v1001 = vpop.f32.mrb[0].mxu0
          %1002 = vmatprep.mubr.bf16.mxu0 %v741
          %1003 = vmatmul.mubr.bf16.gmra.mrb[0].mxu0 %v740
          %v1004 = vpop.f32.mrb[0].mxu0
          %v1005 = vadd.f32 0.0, %v1004
          %v1006 = vpop.f32.mrb[0].mxu0
          %v1007 = vpop.f32.mrb[0].mxu0
          %v1008 = vadd.f32 0.0, %v1007
          %v1009 = vpop.f32.mrb[0].mxu0
          %1010 = vmatprep.mubr.bf16.mxu0 %v743
          %1011 = vmatmul.mubr.bf16.gmra.mrb[0].mxu0 %v742
          %v1012 = vpop.f32.mrb[0].mxu0
          %v1013 = vadd.f32 0.0, %v1012
          %v1014 = vpop.f32.mrb[0].mxu0
          %v1015 = vpop.f32.mrb[0].mxu0
          %v1016 = vadd.f32 0.0, %v1015
          %v1017 = vpop.f32.mrb[0].mxu0
          %1018 = vmatprep.mubr.bf16.mxu0 %v745
          %1019 = vmatmul.mubr.bf16.gmra.mrb[0].mxu0 %v744
          %v1020 = vpop.f32.mrb[0].mxu0
          %v1021 = vadd.f32 0.0, %v1020
          %v1022 = vpop.f32.mrb[0].mxu0
          %v1023 = vpop.f32.mrb[0].mxu0
          %v1024 = vadd.f32 0.0, %v1023
          %v1025 = vpop.f32.mrb[0].mxu0
          %1026 = vmatprep.mubr.bf16.mxu0 %v747
          %1027 = vmatmul.mubr.bf16.gmra.mrb[0].mxu0 %v746
          %v1028 = vpop.f32.mrb[0].mxu0
          %v1029 = vadd.f32 0.0, %v1028
          %v1030 = vpop.f32.mrb[0].mxu0
          %v1031 = vpop.f32.mrb[0].mxu0
          %v1032 = vadd.f32 0.0, %v1031
          %v1033 = vpop.f32.mrb[0].mxu0
          %1034 = vmatprep.mubr.bf16.mxu0 %v749
          %1035 = vmatmul.mubr.bf16.gmra.mrb[0].mxu0 %v748
          %v1036 = vpop.f32.mrb[0].mxu0
          %v1037 = vadd.f32 0.0, %v1036
          %v1038 = vpop.f32.mrb[0].mxu0
          %v1039 = vpop.f32.mrb[0].mxu0
          %v1040 = vadd.f32 0.0, %v1039
          %v1041 = vpop.f32.mrb[0].mxu0
          %1042 = vmatprep.mubr.bf16.mxu0 %v751
          %1043 = vmatmul.mubr.bf16.gmra.mrb[0].mxu0 %v750
          %v1044 = vpop.f32.mrb[0].mxu0
          %v1045 = vadd.f32 0.0, %v1044
          %v1046 = vpop.f32.mrb[0].mxu0
          %v1047 = vpop.f32.mrb[0].mxu0
          %v1048 = vadd.f32 0.0, %v1047
          %v1049 = vpop.f32.mrb[0].mxu0
          %1050 = vmatprep.mubr.bf16.mxu0 %v753
          %1051 = vmatmul.mubr.bf16.gmra.mrb[0].mxu0 %v752
          %v1052 = vpop.f32.mrb[0].mxu0
          %v1053 = vadd.f32 0.0, %v1052
          %v1054 = vpop.f32.mrb[0].mxu0
          %v1055 = vpop.f32.mrb[0].mxu0
          %v1056 = vadd.f32 0.0, %v1055
          %v1057 = vpop.f32.mrb[0].mxu0
          %1058 = vmatprep.mubr.bf16.mxu0 %v755
          %1059 = vmatmul.mubr.bf16.gmra.mrb[0].mxu0 %v754
          %v1060 = vpop.f32.mrb[0].mxu0
          %v1061 = vadd.f32 0.0, %v1060
          %v1062 = vpop.f32.mrb[0].mxu0
          %v1063 = vpop.f32.mrb[0].mxu0
          %v1064 = vadd.f32 0.0, %v1063
          %v1065 = vpop.f32.mrb[0].mxu0
          %1066 = vmatprep.mubr.bf16.mxu0 %v757
          %1067 = vmatmul.mubr.bf16.gmra.mrb[0].mxu0 %v756
          %v1068 = vpop.f32.mrb[0].mxu0
          %v1069 = vadd.f32 0.0, %v1068
          %v1070 = vpop.f32.mrb[0].mxu0
          %v1071 = vpop.f32.mrb[0].mxu0
          %v1072 = vadd.f32 0.0, %v1071
          %v1073 = vpop.f32.mrb[0].mxu0
          %1074 = vmatprep.mubr.bf16.mxu0 %v759
          %1075 = vmatmul.mubr.bf16.gmra.mrb[0].mxu0 %v758
          %v1076 = vpop.f32.mrb[0].mxu0
          %v1077 = vadd.f32 0.0, %v1076
          %v1078 = vpop.f32.mrb[0].mxu0
          %v1079 = vpop.f32.mrb[0].mxu0
          %v1080 = vadd.f32 0.0, %v1079
          %v1081 = vpop.f32.mrb[0].mxu0
          %1082 = vmatprep.mubr.bf16.mxu0 %v761
          %1083 = vmatmul.mubr.bf16.gmra.mrb[0].mxu0 %v760
          %v1084 = vpop.f32.mrb[0].mxu0
          %v1085 = vadd.f32 0.0, %v1084
          %v1086 = vpop.f32.mrb[0].mxu0
          %v1087 = vpop.f32.mrb[0].mxu0
          %v1088 = vadd.f32 0.0, %v1087
          %v1089 = vpop.f32.mrb[0].mxu0
          %1090 = vmatprep.mubr.bf16.mxu0 %v763
          %1091 = vmatmul.mubr.bf16.gmra.mrb[0].mxu0 %v762
          %v1092 = vpop.f32.mrb[0].mxu0
          %v1093 = vadd.f32 0.0, %v1092
          %v1094 = vpop.f32.mrb[0].mxu0
          %v1095 = vpop.f32.mrb[0].mxu0
          %v1096 = vadd.f32 0.0, %v1095
          %v1097 = vpop.f32.mrb[0].mxu0
          %1098 = vmatprep.mubr.bf16.mxu0 %v765
          %1099 = vmatmul.mubr.bf16.gmra.mrb[0].mxu0 %v764
          %v1100 = vpop.f32.mrb[0].mxu0
          %v1101 = vadd.f32 0.0, %v1100
          %v1102 = vpop.f32.mrb[0].mxu0
          %v1103 = vpop.f32.mrb[0].mxu0
          %v1104 = vadd.f32 0.0, %v1103
          %v1105 = vpop.f32.mrb[0].mxu0
          %1106 = vmatprep.mubr.bf16.mxu0 %v767
          %1107 = vmatmul.mubr.bf16.gmra.mrb[0].mxu0 %v766
          %v1108 = vpop.f32.mrb[0].mxu0
          %v1109 = vadd.f32 0.0, %v1108
          %v1110 = vpop.f32.mrb[0].mxu0
          %v1111 = vpop.f32.mrb[0].mxu0
          %v1112 = vadd.f32 0.0, %v1111
          %v1113 = vpop.f32.mrb[0].mxu0
          %1114 = vmatprep.mubr.bf16.mxu0 %v769
          %1115 = vmatmul.mubr.bf16.gmra.mrb[0].mxu0 %v768
          %v1116 = vpop.f32.mrb[0].mxu0
          %v1117 = vadd.f32 0.0, %v1116
          %v1118 = vpop.f32.mrb[0].mxu0
          %v1119 = vpop.f32.mrb[0].mxu0
          %v1120 = vadd.f32 0.0, %v1119
          %v1121 = vpop.f32.mrb[0].mxu0
          %1122 = vmatprep.mubr.bf16.mxu0 %v771
          %1123 = vmatmul.mubr.bf16.gmra.mrb[0].mxu0 %v770
          %v1124 = vpop.f32.mrb[0].mxu0
          %v1125 = vadd.f32 0.0, %v1124
          %v1126 = vpop.f32.mrb[0].mxu0
          %v1127 = vpop.f32.mrb[0].mxu0
          %v1128 = vadd.f32 0.0, %v1127
          %v1129 = vpop.f32.mrb[0].mxu0
          %1130 = vmatprep.mubr.bf16.mxu0 %v773
          %1131 = vmatmul.mubr.bf16.gmra.mrb[0].mxu0 %v772
          %v1132 = vpop.f32.mrb[0].mxu0
          %v1133 = vadd.f32 0.0, %v1132
          %v1134 = vpop.f32.mrb[0].mxu0
          %v1135 = vpop.f32.mrb[0].mxu0
          %v1136 = vadd.f32 0.0, %v1135
          %v1137 = vpop.f32.mrb[0].mxu0
          %1138 = vmatprep.mubr.bf16.mxu0 %v775
          %1139 = vmatmul.mubr.bf16.gmra.mrb[0].mxu0 %v774
          %v1140 = vpop.f32.mrb[0].mxu0
          %v1141 = vadd.f32 0.0, %v1140
          %v1142 = vpop.f32.mrb[0].mxu0
          %v1143 = vpop.f32.mrb[0].mxu0
          %v1144 = vadd.f32 0.0, %v1143
          %v1145 = vpop.f32.mrb[0].mxu0
          %1146 = vmatprep.mubr.bf16.mxu0 %v777
          %1147 = vmatmul.mubr.bf16.gmra.mrb[0].mxu0 %v776
          %v1148 = vpop.f32.mrb[0].mxu0
          %v1149 = vadd.f32 0.0, %v1148
          %v1150 = vpop.f32.mrb[0].mxu0
          %v1151 = vpop.f32.mrb[0].mxu0
          %v1152 = vadd.f32 0.0, %v1151
          %v1153 = vpop.f32.mrb[0].mxu0
          %1154 = vmatprep.mubr.bf16.mxu0 %v779
          %1155 = vmatmul.mubr.bf16.gmra.mrb[0].mxu0 %v778
          %v1156 = vpop.f32.mrb[0].mxu0
          %v1157 = vadd.f32 0.0, %v1156
          %v1158 = vpop.f32.mrb[0].mxu0
          %v1159 = vpop.f32.mrb[0].mxu0
          %v1160 = vadd.f32 0.0, %v1159
          %v1161 = vpop.f32.mrb[0].mxu0
          %1162 = vmatprep.mubr.bf16.mxu0 %v781
          %1163 = vmatmul.mubr.bf16.gmra.mrb[0].mxu0 %v780
          %v1164 = vpop.f32.mrb[0].mxu0
          %v1165 = vadd.f32 0.0, %v1164
          %v1166 = vpop.f32.mrb[0].mxu0
          %v1167 = vpop.f32.mrb[0].mxu0
          %v1168 = vadd.f32 0.0, %v1167
          %v1169 = vpop.f32.mrb[0].mxu0
          %1170 = vmatprep.mubr.bf16.mxu0 %v783
          %1171 = vmatmul.mubr.bf16.gmra.mrb[0].mxu0 %v782
          %v1172 = vpop.f32.mrb[0].mxu0
          %v1173 = vadd.f32 0.0, %v1172
          %v1174 = vpop.f32.mrb[0].mxu0
          %v1175 = vpop.f32.mrb[0].mxu0
          %v1176 = vadd.f32 0.0, %v1175
          %v1177 = vpop.f32.mrb[0].mxu0
          %1178 = vmatprep.mubr.bf16.mxu0 %v785
          %1179 = vmatmul.mubr.bf16.gmra.mrb[0].mxu0 %v784
          %v1180 = vpop.f32.mrb[0].mxu0
          %v1181 = vadd.f32 0.0, %v1180
          %v1182 = vpop.f32.mrb[0].mxu0
          %v1183 = vpop.f32.mrb[0].mxu0
          %v1184 = vadd.f32 0.0, %v1183
          %v1185 = vpop.f32.mrb[0].mxu0
          %1186 = vmatprep.mubr.bf16.mxu0 %v787
          %1187 = vmatmul.mubr.bf16.gmra.mrb[0].mxu0 %v786
          %v1188 = vpop.f32.mrb[0].mxu0
          %v1189 = vadd.f32 0.0, %v1188
          %v1190 = vpop.f32.mrb[0].mxu0
          %v1191 = vpop.f32.mrb[0].mxu0
          %v1192 = vadd.f32 0.0, %v1191
          %v1193 = vpop.f32.mrb[0].mxu0
          %1194 = vmatprep.mubr.bf16.mxu0 %v789
          %1195 = vmatmul.mubr.bf16.gmra.mrb[0].mxu0 %v788
          %v1196 = vpop.f32.mrb[0].mxu0
          %v1197 = vadd.f32 0.0, %v1196
          %v1198 = vpop.f32.mrb[0].mxu0
          %v1199 = vpop.f32.mrb[0].mxu0
          %v1200 = vadd.f32 0.0, %v1199
          %v1201 = vpop.f32.mrb[0].mxu0
          %1202 = vmatprep.mubr.bf16.mxu0 %v791
          %1203 = vmatmul.mubr.bf16.gmra.mrb[0].mxu0 %v790
          %v1204 = vpop.f32.mrb[0].mxu0
          %v1205 = vadd.f32 0.0, %v1204
          %v1206 = vpop.f32.mrb[0].mxu0
          %v1207 = vpop.f32.mrb[0].mxu0
          %v1208 = vadd.f32 0.0, %v1207
          %v1209 = vpop.f32.mrb[0].mxu0
          %1210 = vmatprep.mubr.bf16.mxu0 %v793
          %1211 = vmatmul.mubr.bf16.gmra.mrb[0].mxu0 %v792
          %v1212 = vpop.f32.mrb[0].mxu0
          %v1213 = vadd.f32 0.0, %v1212
          %v1214 = vpop.f32.mrb[0].mxu0
          %v1215 = vpop.f32.mrb[0].mxu0
          %v1216 = vadd.f32 0.0, %v1215
          %v1217 = vpop.f32.mrb[0].mxu0
          %1218 = vmatprep.mubr.bf16.mxu0 %v795
          %1219 = vmatmul.mubr.bf16.gmra.mrb[0].mxu0 %v794
          %v1220 = vpop.f32.mrb[0].mxu0
          %v1221 = vadd.f32 0.0, %v1220
          %v1222 = vpop.f32.mrb[0].mxu0
          %v1223 = vpop.f32.mrb[0].mxu0
          %v1224 = vadd.f32 0.0, %v1223
          %v1225 = vpop.f32.mrb[0].mxu0
          %1226 = vmatprep.mubr.bf16.mxu0 %v797
          %1227 = vmatmul.mubr.bf16.gmra.mrb[0].mxu0 %v796
          %v1228 = vpop.f32.mrb[0].mxu0
          %v1229 = vadd.f32 0.0, %v1228
          %v1230 = vpop.f32.mrb[0].mxu0
          %v1231 = vpop.f32.mrb[0].mxu0
          %v1232 = vadd.f32 0.0, %v1231
          %v1233 = vpop.f32.mrb[0].mxu0
          %1234 = vmatprep.mubr.bf16.mxu0 %v799
          %1235 = vmatmul.mubr.bf16.gmra.mrb[0].mxu0 %v798
          %v1236 = vpop.f32.mrb[0].mxu0
          %v1237 = vadd.f32 0.0, %v1236
          %v1238 = vpop.f32.mrb[0].mxu0
          %v1239 = vpop.f32.mrb[0].mxu0
          %v1240 = vadd.f32 0.0, %v1239
          %v1241 = vpop.f32.mrb[0].mxu0
          %1242 = vmatprep.mubr.bf16.mxu0 %v801
          %1243 = vmatmul.mubr.bf16.gmra.mrb[0].mxu0 %v800
          %v1244 = vpop.f32.mrb[0].mxu0
          %v1245 = vadd.f32 0.0, %v1244
          %v1246 = vpop.f32.mrb[0].mxu0
          %v1247 = vpop.f32.mrb[0].mxu0
          %v1248 = vadd.f32 0.0, %v1247
          %v1249 = vpop.f32.mrb[0].mxu0
          %1250 = vdwg.mxu0
          %v1251 = vadd.f32 %v382, %v997
          %v1252 = vadd.f32 %v383, %v1000
          %v1253 = vadd.f32 %v384, %v1005
          %v1254 = vadd.f32 %v385, %v1008
          %v1255 = vadd.f32 %v386, %v1013
          %v1256 = vadd.f32 %v387, %v1016
          %v1257 = vadd.f32 %v388, %v1021
          %v1258 = vadd.f32 %v389, %v1024
          %v1259 = vadd.f32 %v390, %v1029
          %v1260 = vadd.f32 %v391, %v1032
          %v1261 = vadd.f32 %v392, %v1037
          %v1262 = vadd.f32 %v393, %v1040
          %v1263 = vadd.f32 %v394, %v1045
          %v1264 = vadd.f32 %v395, %v1048
          %v1265 = vadd.f32 %v396, %v1053
          %v1266 = vadd.f32 %v397, %v1056
          %v1267 = vadd.f32 %v398, %v1061
          %v1268 = vadd.f32 %v399, %v1064
          %v1269 = vadd.f32 %v400, %v1069
          %v1270 = vadd.f32 %v401, %v1072
          %v1271 = vadd.f32 %v402, %v1077
          %v1272 = vadd.f32 %v403, %v1080
          %v1273 = vadd.f32 %v404, %v1085
          %v1274 = vadd.f32 %v405, %v1088
          %v1275 = vadd.f32 %v406, %v1093
          %v1276 = vadd.f32 %v407, %v1096
          %v1277 = vadd.f32 %v408, %v1101
          %v1278 = vadd.f32 %v409, %v1104
          %v1279 = vadd.f32 %v410, %v1109
          %v1280 = vadd.f32 %v411, %v1112
          %v1281 = vadd.f32 %v412, %v1117
          %v1282 = vadd.f32 %v413, %v1120
          %v1283 = vadd.f32 %v414, %v1125
          %v1284 = vadd.f32 %v415, %v1128
          %v1285 = vadd.f32 %v416, %v1133
          %v1286 = vadd.f32 %v417, %v1136
          %v1287 = vadd.f32 %v418, %v1141
          %v1288 = vadd.f32 %v419, %v1144
          %v1289 = vadd.f32 %v420, %v1149
          %v1290 = vadd.f32 %v421, %v1152
          %v1291 = vadd.f32 %v422, %v1157
          %v1292 = vadd.f32 %v423, %v1160
          %v1293 = vadd.f32 %v424, %v1165
          %v1294 = vadd.f32 %v425, %v1168
          %v1295 = vadd.f32 %v426, %v1173
          %v1296 = vadd.f32 %v427, %v1176
          %v1297 = vadd.f32 %v428, %v1181
          %v1298 = vadd.f32 %v429, %v1184
          %v1299 = vadd.f32 %v430, %v1189
          %v1300 = vadd.f32 %v431, %v1192
          %v1301 = vadd.f32 %v432, %v1197
          %v1302 = vadd.f32 %v433, %v1200
          %v1303 = vadd.f32 %v434, %v1205
          %v1304 = vadd.f32 %v435, %v1208
          %v1305 = vadd.f32 %v436, %v1213
          %v1306 = vadd.f32 %v437, %v1216
          %v1307 = vadd.f32 %v438, %v1221
          %v1308 = vadd.f32 %v439, %v1224
          %v1309 = vadd.f32 %v440, %v1229
          %v1310 = vadd.f32 %v441, %v1232
          %v1311 = vadd.f32 %v442, %v1237
          %v1312 = vadd.f32 %v443, %v1240
          %v1313 = vadd.f32 %v444, %v1245
          %v1314 = vadd.f32 %v445, %v1248
          %1315 = vst [vmem:[#allocation2] sm:$0xff] %v1251
          %1316 = vst [vmem:[#allocation2 + $0x8] sm:$0xff] %v1252
          %1317 = vst [vmem:[#allocation2 + $0x10] sm:$0xff] %v1253
          %1318 = vst [vmem:[#allocation2 + $0x18] sm:$0xff] %v1254
          %1319 = vst [vmem:[#allocation2 + $0x20] sm:$0xff] %v1255
          %1320 = vst [vmem:[#allocation2 + $0x28] sm:$0xff] %v1256
          %1321 = vst [vmem:[#allocation2 + $0x30] sm:$0xff] %v1257
          %1322 = vst [vmem:[#allocation2 + $0x38] sm:$0xff] %v1258
          %1323 = vst [vmem:[#allocation2 + $0x40] sm:$0xff] %v1259
          %1324 = vst [vmem:[#allocation2 + $0x48] sm:$0xff] %v1260
          %1325 = vst [vmem:[#allocation2 + $0x50] sm:$0xff] %v1261
          %1326 = vst [vmem:[#allocation2 + $0x58] sm:$0xff] %v1262
          %1327 = vst [vmem:[#allocation2 + $0x60] sm:$0xff] %v1263
          %1328 = vst [vmem:[#allocation2 + $0x68] sm:$0xff] %v1264
          %1329 = vst [vmem:[#allocation2 + $0x70] sm:$0xff] %v1265
          %1330 = vst [vmem:[#allocation2 + $0x78] sm:$0xff] %v1266
          %1331 = vst [vmem:[#allocation2 + $0x80] sm:$0xff] %v1267
          %1332 = vst [vmem:[#allocation2 + $0x88] sm:$0xff] %v1268
          %1333 = vst [vmem:[#allocation2 + $0x90] sm:$0xff] %v1269
          %1334 = vst [vmem:[#allocation2 + $0x98] sm:$0xff] %v1270
          %1335 = vst [vmem:[#allocation2 + $0xa0] sm:$0xff] %v1271
          %1336 = vst [vmem:[#allocation2 + $0xa8] sm:$0xff] %v1272
          %1337 = vst [vmem:[#allocation2 + $0xb0] sm:$0xff] %v1273
          %1338 = vst [vmem:[#allocation2 + $0xb8] sm:$0xff] %v1274
          %1339 = vst [vmem:[#allocation2 + $0xc0] sm:$0xff] %v1275
          %1340 = vst [vmem:[#allocation2 + $0xc8] sm:$0xff] %v1276
          %1341 = vst [vmem:[#allocation2 + $0xd0] sm:$0xff] %v1277
          %1342 = vst [vmem:[#allocation2 + $0xd8] sm:$0xff] %v1278
          %1343 = vst [vmem:[#allocation2 + $0xe0] sm:$0xff] %v1279
          %1344 = vst [vmem:[#allocation2 + $0xe8] sm:$0xff] %v1280
          %1345 = vst [vmem:[#allocation2 + $0xf0] sm:$0xff] %v1281
          %1346 = vst [vmem:[#allocation2 + $0xf8] sm:$0xff] %v1282
          %1347 = vst [vmem:[#allocation2 + $0x100] sm:$0xff] %v1283
          %1348 = vst [vmem:[#allocation2 + $0x108] sm:$0xff] %v1284
          %1349 = vst [vmem:[#allocation2 + $0x110] sm:$0xff] %v1285
          %1350 = vst [vmem:[#allocation2 + $0x118] sm:$0xff] %v1286
          %1351 = vst [vmem:[#allocation2 + $0x120] sm:$0xff] %v1287
          %1352 = vst [vmem:[#allocation2 + $0x128] sm:$0xff] %v1288
          %1353 = vst [vmem:[#allocation2 + $0x130] sm:$0xff] %v1289
          %1354 = vst [vmem:[#allocation2 + $0x138] sm:$0xff] %v1290
          %1355 = vst [vmem:[#allocation2 + $0x140] sm:$0xff] %v1291
          %1356 = vst [vmem:[#allocation2 + $0x148] sm:$0xff] %v1292
          %1357 = vst [vmem:[#allocation2 + $0x150] sm:$0xff] %v1293
          %1358 = vst [vmem:[#allocation2 + $0x158] sm:$0xff] %v1294
          %1359 = vst [vmem:[#allocation2 + $0x160] sm:$0xff] %v1295
          %1360 = vst [vmem:[#allocation2 + $0x168] sm:$0xff] %v1296
          %1361 = vst [vmem:[#allocation2 + $0x170] sm:$0xff] %v1297
          %1362 = vst [vmem:[#allocation2 + $0x178] sm:$0xff] %v1298
          %1363 = vst [vmem:[#allocation2 + $0x180] sm:$0xff] %v1299
          %1364 = vst [vmem:[#allocation2 + $0x188] sm:$0xff] %v1300
          %1365 = vst [vmem:[#allocation2 + $0x190] sm:$0xff] %v1301
          %1366 = vst [vmem:[#allocation2 + $0x198] sm:$0xff] %v1302
          %1367 = vst [vmem:[#allocation2 + $0x1a0] sm:$0xff] %v1303
          %1368 = vst [vmem:[#allocation2 + $0x1a8] sm:$0xff] %v1304
          %1369 = vst [vmem:[#allocation2 + $0x1b0] sm:$0xff] %v1305
          %1370 = vst [vmem:[#allocation2 + $0x1b8] sm:$0xff] %v1306
          %1371 = vst [vmem:[#allocation2 + $0x1c0] sm:$0xff] %v1307
          %1372 = vst [vmem:[#allocation2 + $0x1c8] sm:$0xff] %v1308
          %1373 = vst [vmem:[#allocation2 + $0x1d0] sm:$0xff] %v1309
          %1374 = vst [vmem:[#allocation2 + $0x1d8] sm:$0xff] %v1310
          %1375 = vst [vmem:[#allocation2 + $0x1e0] sm:$0xff] %v1311
          %1376 = vst [vmem:[#allocation2 + $0x1e8] sm:$0xff] %v1312
          %1377 = vst [vmem:[#allocation2 + $0x1f0] sm:$0xff] %v1313
          %1378 = vst [vmem:[#allocation2 + $0x1f8] sm:$0xff] %v1314
        $region56: #{tpu_custom_call.1} parent=35 // pred_fallthru
          _
        %p1379 = scmp.eq.s32.totalorder %s34, 1
        // Predicated region
        $region57: #{tpu_custom_call.1} parent=35 // pred_check
          %p1380 = pneg %p1379
        $region58: #{tpu_custom_call.1} parent=35 // pred_check_branch
          %1382 = sbr.rel (%p1380) target = $region60
        $region59: #{tpu_custom_call.1} parent=35 // pred_region
          %v1383 = vld [vmem:[#allocation2] sm:$0xff]
          %v1384 = vld [vmem:[#allocation2 + $0x8] sm:$0xff]
          %v1385 = vld [vmem:[#allocation2 + $0x10] sm:$0xff]
          %v1386 = vld [vmem:[#allocation2 + $0x18] sm:$0xff]
          %v1387 = vld [vmem:[#allocation2 + $0x20] sm:$0xff]
          %v1388 = vld [vmem:[#allocation2 + $0x28] sm:$0xff]
          %v1389 = vld [vmem:[#allocation2 + $0x30] sm:$0xff]
          %v1390 = vld [vmem:[#allocation2 + $0x38] sm:$0xff]
          %v1391 = vld [vmem:[#allocation2 + $0x40] sm:$0xff]
          %v1392 = vld [vmem:[#allocation2 + $0x48] sm:$0xff]
          %v1393 = vld [vmem:[#allocation2 + $0x50] sm:$0xff]
          %v1394 = vld [vmem:[#allocation2 + $0x58] sm:$0xff]
          %v1395 = vld [vmem:[#allocation2 + $0x60] sm:$0xff]
          %v1396 = vld [vmem:[#allocation2 + $0x68] sm:$0xff]
          %v1397 = vld [vmem:[#allocation2 + $0x70] sm:$0xff]
          %v1398 = vld [vmem:[#allocation2 + $0x78] sm:$0xff]
          %v1399 = vld [vmem:[#allocation2 + $0x80] sm:$0xff]
          %v1400 = vld [vmem:[#allocation2 + $0x88] sm:$0xff]
          %v1401 = vld [vmem:[#allocation2 + $0x90] sm:$0xff]
          %v1402 = vld [vmem:[#allocation2 + $0x98] sm:$0xff]
          %v1403 = vld [vmem:[#allocation2 + $0xa0] sm:$0xff]
          %v1404 = vld [vmem:[#allocation2 + $0xa8] sm:$0xff]
          %v1405 = vld [vmem:[#allocation2 + $0xb0] sm:$0xff]
          %v1406 = vld [vmem:[#allocation2 + $0xb8] sm:$0xff]
          %v1407 = vld [vmem:[#allocation2 + $0xc0] sm:$0xff]
          %v1408 = vld [vmem:[#allocation2 + $0xc8] sm:$0xff]
          %v1409 = vld [vmem:[#allocation2 + $0xd0] sm:$0xff]
          %v1410 = vld [vmem:[#allocation2 + $0xd8] sm:$0xff]
          %v1411 = vld [vmem:[#allocation2 + $0xe0] sm:$0xff]
          %v1412 = vld [vmem:[#allocation2 + $0xe8] sm:$0xff]
          %v1413 = vld [vmem:[#allocation2 + $0xf0] sm:$0xff]
          %v1414 = vld [vmem:[#allocation2 + $0xf8] sm:$0xff]
          %v1415 = vld [vmem:[#allocation2 + $0x100] sm:$0xff]
          %v1416 = vld [vmem:[#allocation2 + $0x108] sm:$0xff]
          %v1417 = vld [vmem:[#allocation2 + $0x110] sm:$0xff]
          %v1418 = vld [vmem:[#allocation2 + $0x118] sm:$0xff]
          %v1419 = vld [vmem:[#allocation2 + $0x120] sm:$0xff]
          %v1420 = vld [vmem:[#allocation2 + $0x128] sm:$0xff]
          %v1421 = vld [vmem:[#allocation2 + $0x130] sm:$0xff]
          %v1422 = vld [vmem:[#allocation2 + $0x138] sm:$0xff]
          %v1423 = vld [vmem:[#allocation2 + $0x140] sm:$0xff]
          %v1424 = vld [vmem:[#allocation2 + $0x148] sm:$0xff]
          %v1425 = vld [vmem:[#allocation2 + $0x150] sm:$0xff]
          %v1426 = vld [vmem:[#allocation2 + $0x158] sm:$0xff]
          %v1427 = vld [vmem:[#allocation2 + $0x160] sm:$0xff]
          %v1428 = vld [vmem:[#allocation2 + $0x168] sm:$0xff]
          %v1429 = vld [vmem:[#allocation2 + $0x170] sm:$0xff]
          %v1430 = vld [vmem:[#allocation2 + $0x178] sm:$0xff]
          %v1431 = vld [vmem:[#allocation2 + $0x180] sm:$0xff]
          %v1432 = vld [vmem:[#allocation2 + $0x188] sm:$0xff]
          %v1433 = vld [vmem:[#allocation2 + $0x190] sm:$0xff]
          %v1434 = vld [vmem:[#allocation2 + $0x198] sm:$0xff]
          %v1435 = vld [vmem:[#allocation2 + $0x1a0] sm:$0xff]
          %v1436 = vld [vmem:[#allocation2 + $0x1a8] sm:$0xff]
          %v1437 = vld [vmem:[#allocation2 + $0x1b0] sm:$0xff]
          %v1438 = vld [vmem:[#allocation2 + $0x1b8] sm:$0xff]
          %v1439 = vld [vmem:[#allocation2 + $0x1c0] sm:$0xff]
          %v1440 = vld [vmem:[#allocation2 + $0x1c8] sm:$0xff]
          %v1441 = vld [vmem:[#allocation2 + $0x1d0] sm:$0xff]
          %v1442 = vld [vmem:[#allocation2 + $0x1d8] sm:$0xff]
          %v1443 = vld [vmem:[#allocation2 + $0x1e0] sm:$0xff]
          %v1444 = vld [vmem:[#allocation2 + $0x1e8] sm:$0xff]
          %v1445 = vld [vmem:[#allocation2 + $0x1f0] sm:$0xff]
          %v1446 = vld [vmem:[#allocation2 + $0x1f8] sm:$0xff]
          %v1447 = vld [vmem:[%s4] sm:$0x1]
          %v1449 = vlaneseq
          %v1450 = vshrl.u32 %v1449, 7
          %v1451 = vsub.s32 0, %v1450
          %v1452 = vrot.slane %v1447, %v1451
          %v1454 = vadd.f32 %v1383, %v1452
          %v1455 = vadd.f32 %v1384, %v1452
          %v1456 = vadd.f32 %v1385, %v1452
          %v1457 = vadd.f32 %v1386, %v1452
          %v1458 = vadd.f32 %v1387, %v1452
          %v1459 = vadd.f32 %v1388, %v1452
          %v1460 = vadd.f32 %v1389, %v1452
          %v1461 = vadd.f32 %v1390, %v1452
          %v1462 = vadd.f32 %v1391, %v1452
          %v1463 = vadd.f32 %v1392, %v1452
          %v1464 = vadd.f32 %v1393, %v1452
          %v1465 = vadd.f32 %v1394, %v1452
          %v1466 = vadd.f32 %v1395, %v1452
          %v1467 = vadd.f32 %v1396, %v1452
          %v1468 = vadd.f32 %v1397, %v1452
          %v1469 = vadd.f32 %v1398, %v1452
          %v1470 = vadd.f32 %v1399, %v1452
          %v1471 = vadd.f32 %v1400, %v1452
          %v1472 = vadd.f32 %v1401, %v1452
          %v1473 = vadd.f32 %v1402, %v1452
          %v1474 = vadd.f32 %v1403, %v1452
          %v1475 = vadd.f32 %v1404, %v1452
          %v1476 = vadd.f32 %v1405, %v1452
          %v1477 = vadd.f32 %v1406, %v1452
          %v1478 = vadd.f32 %v1407, %v1452
          %v1479 = vadd.f32 %v1408, %v1452
          %v1480 = vadd.f32 %v1409, %v1452
          %v1481 = vadd.f32 %v1410, %v1452
          %v1482 = vadd.f32 %v1411, %v1452
          %v1483 = vadd.f32 %v1412, %v1452
          %v1484 = vadd.f32 %v1413, %v1452
          %v1485 = vadd.f32 %v1414, %v1452
          %v1486 = vadd.f32 %v1415, %v1452
          %v1487 = vadd.f32 %v1416, %v1452
          %v1488 = vadd.f32 %v1417, %v1452
          %v1489 = vadd.f32 %v1418, %v1452
          %v1490 = vadd.f32 %v1419, %v1452
          %v1491 = vadd.f32 %v1420, %v1452
          %v1492 = vadd.f32 %v1421, %v1452
          %v1493 = vadd.f32 %v1422, %v1452
          %v1494 = vadd.f32 %v1423, %v1452
          %v1495 = vadd.f32 %v1424, %v1452
          %v1496 = vadd.f32 %v1425, %v1452
          %v1497 = vadd.f32 %v1426, %v1452
          %v1498 = vadd.f32 %v1427, %v1452
          %v1499 = vadd.f32 %v1428, %v1452
          %v1500 = vadd.f32 %v1429, %v1452
          %v1501 = vadd.f32 %v1430, %v1452
          %v1502 = vadd.f32 %v1431, %v1452
          %v1503 = vadd.f32 %v1432, %v1452
          %v1504 = vadd.f32 %v1433, %v1452
          %v1505 = vadd.f32 %v1434, %v1452
          %v1506 = vadd.f32 %v1435, %v1452
          %v1507 = vadd.f32 %v1436, %v1452
          %v1508 = vadd.f32 %v1437, %v1452
          %v1509 = vadd.f32 %v1438, %v1452
          %v1510 = vadd.f32 %v1439, %v1452
          %v1511 = vadd.f32 %v1440, %v1452
          %v1512 = vadd.f32 %v1441, %v1452
          %v1513 = vadd.f32 %v1442, %v1452
          %v1514 = vadd.f32 %v1443, %v1452
          %v1515 = vadd.f32 %v1444, %v1452
          %v1516 = vadd.f32 %v1445, %v1452
          %v1517 = vadd.f32 %v1446, %v1452
          %v1518 = vmax.f32 %v1454, 0.0
          %v1519 = vmax.f32 %v1455, 0.0
          %v1520 = vmax.f32 %v1456, 0.0
          %v1521 = vmax.f32 %v1457, 0.0
          %v1522 = vmax.f32 %v1458, 0.0
          %v1523 = vmax.f32 %v1459, 0.0
          %v1524 = vmax.f32 %v1460, 0.0
          %v1525 = vmax.f32 %v1461, 0.0
          %v1526 = vmax.f32 %v1462, 0.0
          %v1527 = vmax.f32 %v1463, 0.0
          %v1528 = vmax.f32 %v1464, 0.0
          %v1529 = vmax.f32 %v1465, 0.0
          %v1530 = vmax.f32 %v1466, 0.0
          %v1531 = vmax.f32 %v1467, 0.0
          %v1532 = vmax.f32 %v1468, 0.0
          %v1533 = vmax.f32 %v1469, 0.0
          %v1534 = vmax.f32 %v1470, 0.0
          %v1535 = vmax.f32 %v1471, 0.0
          %v1536 = vmax.f32 %v1472, 0.0
          %v1537 = vmax.f32 %v1473, 0.0
          %v1538 = vmax.f32 %v1474, 0.0
          %v1539 = vmax.f32 %v1475, 0.0
          %v1540 = vmax.f32 %v1476, 0.0
          %v1541 = vmax.f32 %v1477, 0.0
          %v1542 = vmax.f32 %v1478, 0.0
          %v1543 = vmax.f32 %v1479, 0.0
          %v1544 = vmax.f32 %v1480, 0.0
          %v1545 = vmax.f32 %v1481, 0.0
          %v1546 = vmax.f32 %v1482, 0.0
          %v1547 = vmax.f32 %v1483, 0.0
          %v1548 = vmax.f32 %v1484, 0.0
          %v1549 = vmax.f32 %v1485, 0.0
          %v1550 = vmax.f32 %v1486, 0.0
          %v1551 = vmax.f32 %v1487, 0.0
          %v1552 = vmax.f32 %v1488, 0.0
          %v1553 = vmax.f32 %v1489, 0.0
          %v1554 = vmax.f32 %v1490, 0.0
          %v1555 = vmax.f32 %v1491, 0.0
          %v1556 = vmax.f32 %v1492, 0.0
          %v1557 = vmax.f32 %v1493, 0.0
          %v1558 = vmax.f32 %v1494, 0.0
          %v1559 = vmax.f32 %v1495, 0.0
          %v1560 = vmax.f32 %v1496, 0.0
          %v1561 = vmax.f32 %v1497, 0.0
          %v1562 = vmax.f32 %v1498, 0.0
          %v1563 = vmax.f32 %v1499, 0.0
          %v1564 = vmax.f32 %v1500, 0.0
          %v1565 = vmax.f32 %v1501, 0.0
          %v1566 = vmax.f32 %v1502, 0.0
          %v1567 = vmax.f32 %v1503, 0.0
          %v1568 = vmax.f32 %v1504, 0.0
          %v1569 = vmax.f32 %v1505, 0.0
          %v1570 = vmax.f32 %v1506, 0.0
          %v1571 = vmax.f32 %v1507, 0.0
          %v1572 = vmax.f32 %v1508, 0.0
          %v1573 = vmax.f32 %v1509, 0.0
          %v1574 = vmax.f32 %v1510, 0.0
          %v1575 = vmax.f32 %v1511, 0.0
          %v1576 = vmax.f32 %v1512, 0.0
          %v1577 = vmax.f32 %v1513, 0.0
          %v1578 = vmax.f32 %v1514, 0.0
          %v1579 = vmax.f32 %v1515, 0.0
          %v1580 = vmax.f32 %v1516, 0.0
          %v1581 = vmax.f32 %v1517, 0.0
          %v1582 = vpack.c.bf16 %v1519, %v1518
          %v1583 = vpack.c.bf16 %v1521, %v1520
          %v1584 = vpack.c.bf16 %v1523, %v1522
          %v1585 = vpack.c.bf16 %v1525, %v1524
          %v1586 = vpack.c.bf16 %v1527, %v1526
          %v1587 = vpack.c.bf16 %v1529, %v1528
          %v1588 = vpack.c.bf16 %v1531, %v1530
          %v1589 = vpack.c.bf16 %v1533, %v1532
          %v1590 = vpack.c.bf16 %v1535, %v1534
          %v1591 = vpack.c.bf16 %v1537, %v1536
          %v1592 = vpack.c.bf16 %v1539, %v1538
          %v1593 = vpack.c.bf16 %v1541, %v1540
          %v1594 = vpack.c.bf16 %v1543, %v1542
          %v1595 = vpack.c.bf16 %v1545, %v1544
          %v1596 = vpack.c.bf16 %v1547, %v1546
          %v1597 = vpack.c.bf16 %v1549, %v1548
          %v1598 = vpack.c.bf16 %v1551, %v1550
          %v1599 = vpack.c.bf16 %v1553, %v1552
          %v1600 = vpack.c.bf16 %v1555, %v1554
          %v1601 = vpack.c.bf16 %v1557, %v1556
          %v1602 = vpack.c.bf16 %v1559, %v1558
          %v1603 = vpack.c.bf16 %v1561, %v1560
          %v1604 = vpack.c.bf16 %v1563, %v1562
          %v1605 = vpack.c.bf16 %v1565, %v1564
          %v1606 = vpack.c.bf16 %v1567, %v1566
          %v1607 = vpack.c.bf16 %v1569, %v1568
          %v1608 = vpack.c.bf16 %v1571, %v1570
          %v1609 = vpack.c.bf16 %v1573, %v1572
          %v1610 = vpack.c.bf16 %v1575, %v1574
          %v1611 = vpack.c.bf16 %v1577, %v1576
          %v1612 = vpack.c.bf16 %v1579, %v1578
          %v1613 = vpack.c.bf16 %v1581, %v1580
          %v1614 = vld [vmem:[#allocation11] sm:$0xf]
          %v1615 = vld [vmem:[#allocation11 + $0x4] sm:$0xf]
          %v1616 = vld [vmem:[#allocation11 + $0x8] sm:$0xf]
          %v1617 = vld [vmem:[#allocation11 + $0xc] sm:$0xf]
          %v1618 = vld [vmem:[#allocation11 + $0x10] sm:$0xf]
          %v1619 = vld [vmem:[#allocation11 + $0x14] sm:$0xf]
          %v1620 = vld [vmem:[#allocation11 + $0x18] sm:$0xf]
          %v1621 = vld [vmem:[#allocation11 + $0x1c] sm:$0xf]
          %v1622 = vld [vmem:[#allocation11 + $0x20] sm:$0xf]
          %v1623 = vld [vmem:[#allocation11 + $0x24] sm:$0xf]
          %v1624 = vld [vmem:[#allocation11 + $0x28] sm:$0xf]
          %v1625 = vld [vmem:[#allocation11 + $0x2c] sm:$0xf]
          %v1626 = vld [vmem:[#allocation11 + $0x30] sm:$0xf]
          %v1627 = vld [vmem:[#allocation11 + $0x34] sm:$0xf]
          %v1628 = vld [vmem:[#allocation11 + $0x38] sm:$0xf]
          %v1629 = vld [vmem:[#allocation11 + $0x3c] sm:$0xf]
          %v1646 = vunpack.c.l.b16 %v1614
          %v1647 = vunpack.c.l.b16 %v1615
          %v1648 = vunpack.c.l.b16 %v1616
          %v1649 = vunpack.c.l.b16 %v1617
          %v1650 = vunpack.c.l.b16 %v1618
          %v1651 = vunpack.c.l.b16 %v1619
          %v1652 = vunpack.c.l.b16 %v1620
          %v1653 = vunpack.c.l.b16 %v1621
          %v1654 = vunpack.c.l.b16 %v1622
          %v1655 = vunpack.c.l.b16 %v1623
          %v1656 = vunpack.c.l.b16 %v1624
          %v1657 = vunpack.c.l.b16 %v1625
          %v1658 = vunpack.c.l.b16 %v1626
          %v1659 = vunpack.c.l.b16 %v1627
          %v1660 = vunpack.c.l.b16 %v1628
          %v1661 = vunpack.c.l.b16 %v1629
          %v1662 = vpack.c.b16 %v1647, %v1646
          %v1663 = vpack.c.b16 %v1649, %v1648
          %v1664 = vpack.c.b16 %v1651, %v1650
          %v1665 = vpack.c.b16 %v1653, %v1652
          %v1666 = vpack.c.b16 %v1655, %v1654
          %v1667 = vpack.c.b16 %v1657, %v1656
          %v1668 = vpack.c.b16 %v1659, %v1658
          %v1669 = vpack.c.b16 %v1661, %v1660
          %1678 = vmatprep.subr.bf16.mxu0 0
          %1679 = vmatpush1.bf16.msra.mxu0 %v1662
          %1680 = vmatprep.subr.bf16.mxu0 0
          %1681 = vmatpush1.bf16.msra.mxu0 %v1663
          %1682 = vmatprep.subr.bf16.mxu0 0
          %1683 = vmatpush1.bf16.msra.mxu0 %v1664
          %1684 = vmatprep.subr.bf16.mxu0 0
          %1685 = vmatpush1.bf16.msra.mxu0 %v1665
          %1686 = vmatprep.subr.bf16.mxu0 0
          %1687 = vmatpush1.bf16.msra.mxu0 %v1666
          %1688 = vmatprep.subr.bf16.mxu0 0
          %1689 = vmatpush1.bf16.msra.mxu0 %v1667
          %1690 = vmatprep.subr.bf16.mxu0 0
          %1691 = vmatpush1.bf16.msra.mxu0 %v1668
          %1692 = vmatprep.subr.bf16.mxu0 0
          %1693 = vmatpush1.bf16.msra.mxu0 %v1669
          %1694 = vmatprep.subr.bf16.mxu0 0
          %1695 = vmatpush1.bf16.msra.mxu0 0
          %1696 = vmatprep.subr.bf16.mxu0 0
          %1697 = vmatpush1.bf16.msra.mxu0 0
          %1698 = vmatprep.subr.bf16.mxu0 0
          %1699 = vmatpush1.bf16.msra.mxu0 0
          %1700 = vmatprep.subr.bf16.mxu0 0
          %1701 = vmatpush1.bf16.msra.mxu0 0
          %1702 = vmatprep.subr.bf16.mxu0 0
          %1703 = vmatpush1.bf16.msra.mxu0 0
          %1704 = vmatprep.subr.bf16.mxu0 0
          %1705 = vmatpush1.bf16.msra.mxu0 0
          %1706 = vmatprep.subr.bf16.mxu0 0
          %1707 = vmatpush1.bf16.msra.mxu0 0
          %1708 = vmatprep.subr.bf16.mxu0 0
          %1709 = vmatpush1.bf16.msra.mxu0 0
          %1710 = vmatprep.mubr.bf16.mxu0 0
          %1711 = vmatmul.mubr.bf16.gmra.mrb[0].mxu0 %v1582
          %v1712 = vpop.f32.mrb[0].mxu0
          %v1713 = vadd.f32 0.0, %v1712
          %v1714 = vpop.f32.mrb[0].mxu0
          %v1715 = vpop.f32.mrb[0].mxu0
          %v1716 = vadd.f32 0.0, %v1715
          %v1717 = vpop.f32.mrb[0].mxu0
          %1718 = vmatprep.mubr.bf16.mxu0 0
          %1719 = vmatmul.mubr.bf16.gmra.mrb[0].mxu0 %v1583
          %v1720 = vpop.f32.mrb[0].mxu0
          %v1721 = vadd.f32 0.0, %v1720
          %v1722 = vpop.f32.mrb[0].mxu0
          %v1723 = vpop.f32.mrb[0].mxu0
          %v1724 = vadd.f32 0.0, %v1723
          %v1725 = vpop.f32.mrb[0].mxu0
          %1726 = vmatprep.mubr.bf16.mxu0 0
          %1727 = vmatmul.mubr.bf16.gmra.mrb[0].mxu0 %v1584
          %v1728 = vpop.f32.mrb[0].mxu0
          %v1729 = vadd.f32 0.0, %v1728
          %v1730 = vpop.f32.mrb[0].mxu0
          %v1731 = vpop.f32.mrb[0].mxu0
          %v1732 = vadd.f32 0.0, %v1731
          %v1733 = vpop.f32.mrb[0].mxu0
          %1734 = vmatprep.mubr.bf16.mxu0 0
          %1735 = vmatmul.mubr.bf16.gmra.mrb[0].mxu0 %v1585
          %v1736 = vpop.f32.mrb[0].mxu0
          %v1737 = vadd.f32 0.0, %v1736
          %v1738 = vpop.f32.mrb[0].mxu0
          %v1739 = vpop.f32.mrb[0].mxu0
          %v1740 = vadd.f32 0.0, %v1739
          %v1741 = vpop.f32.mrb[0].mxu0
          %1742 = vmatprep.mubr.bf16.mxu0 0
          %1743 = vmatmul.mubr.bf16.gmra.mrb[0].mxu0 %v1586
          %v1744 = vpop.f32.mrb[0].mxu0
          %v1745 = vadd.f32 0.0, %v1744
          %v1746 = vpop.f32.mrb[0].mxu0
          %v1747 = vpop.f32.mrb[0].mxu0
          %v1748 = vadd.f32 0.0, %v1747
          %v1749 = vpop.f32.mrb[0].mxu0
          %1750 = vmatprep.mubr.bf16.mxu0 0
          %1751 = vmatmul.mubr.bf16.gmra.mrb[0].mxu0 %v1587
          %v1752 = vpop.f32.mrb[0].mxu0
          %v1753 = vadd.f32 0.0, %v1752
          %v1754 = vpop.f32.mrb[0].mxu0
          %v1755 = vpop.f32.mrb[0].mxu0
          %v1756 = vadd.f32 0.0, %v1755
          %v1757 = vpop.f32.mrb[0].mxu0
          %1758 = vmatprep.mubr.bf16.mxu0 0
          %1759 = vmatmul.mubr.bf16.gmra.mrb[0].mxu0 %v1588
          %v1760 = vpop.f32.mrb[0].mxu0
          %v1761 = vadd.f32 0.0, %v1760
          %v1762 = vpop.f32.mrb[0].mxu0
          %v1763 = vpop.f32.mrb[0].mxu0
          %v1764 = vadd.f32 0.0, %v1763
          %v1765 = vpop.f32.mrb[0].mxu0
          %1766 = vmatprep.mubr.bf16.mxu0 0
          %1767 = vmatmul.mubr.bf16.gmra.mrb[0].mxu0 %v1589
          %v1768 = vpop.f32.mrb[0].mxu0
          %v1769 = vadd.f32 0.0, %v1768
          %v1770 = vpop.f32.mrb[0].mxu0
          %v1771 = vpop.f32.mrb[0].mxu0
          %v1772 = vadd.f32 0.0, %v1771
          %v1773 = vpop.f32.mrb[0].mxu0
          %1774 = vmatprep.mubr.bf16.mxu0 0
          %1775 = vmatmul.mubr.bf16.gmra.mrb[0].mxu0 %v1590
          %v1776 = vpop.f32.mrb[0].mxu0
          %v1777 = vadd.f32 0.0, %v1776
          %v1778 = vpop.f32.mrb[0].mxu0
          %v1779 = vpop.f32.mrb[0].mxu0
          %v1780 = vadd.f32 0.0, %v1779
          %v1781 = vpop.f32.mrb[0].mxu0
          %1782 = vmatprep.mubr.bf16.mxu0 0
          %1783 = vmatmul.mubr.bf16.gmra.mrb[0].mxu0 %v1591
          %v1784 = vpop.f32.mrb[0].mxu0
          %v1785 = vadd.f32 0.0, %v1784
          %v1786 = vpop.f32.mrb[0].mxu0
          %v1787 = vpop.f32.mrb[0].mxu0
          %v1788 = vadd.f32 0.0, %v1787
          %v1789 = vpop.f32.mrb[0].mxu0
          %1790 = vmatprep.mubr.bf16.mxu0 0
          %1791 = vmatmul.mubr.bf16.gmra.mrb[0].mxu0 %v1592
          %v1792 = vpop.f32.mrb[0].mxu0
          %v1793 = vadd.f32 0.0, %v1792
          %v1794 = vpop.f32.mrb[0].mxu0
          %v1795 = vpop.f32.mrb[0].mxu0
          %v1796 = vadd.f32 0.0, %v1795
          %v1797 = vpop.f32.mrb[0].mxu0
          %1798 = vmatprep.mubr.bf16.mxu0 0
          %1799 = vmatmul.mubr.bf16.gmra.mrb[0].mxu0 %v1593
          %v1800 = vpop.f32.mrb[0].mxu0
          %v1801 = vadd.f32 0.0, %v1800
          %v1802 = vpop.f32.mrb[0].mxu0
          %v1803 = vpop.f32.mrb[0].mxu0
          %v1804 = vadd.f32 0.0, %v1803
          %v1805 = vpop.f32.mrb[0].mxu0
          %1806 = vmatprep.mubr.bf16.mxu0 0
          %1807 = vmatmul.mubr.bf16.gmra.mrb[0].mxu0 %v1594
          %v1808 = vpop.f32.mrb[0].mxu0
          %v1809 = vadd.f32 0.0, %v1808
          %v1810 = vpop.f32.mrb[0].mxu0
          %v1811 = vpop.f32.mrb[0].mxu0
          %v1812 = vadd.f32 0.0, %v1811
          %v1813 = vpop.f32.mrb[0].mxu0
          %1814 = vmatprep.mubr.bf16.mxu0 0
          %1815 = vmatmul.mubr.bf16.gmra.mrb[0].mxu0 %v1595
          %v1816 = vpop.f32.mrb[0].mxu0
          %v1817 = vadd.f32 0.0, %v1816
          %v1818 = vpop.f32.mrb[0].mxu0
          %v1819 = vpop.f32.mrb[0].mxu0
          %v1820 = vadd.f32 0.0, %v1819
          %v1821 = vpop.f32.mrb[0].mxu0
          %1822 = vmatprep.mubr.bf16.mxu0 0
          %1823 = vmatmul.mubr.bf16.gmra.mrb[0].mxu0 %v1596
          %v1824 = vpop.f32.mrb[0].mxu0
          %v1825 = vadd.f32 0.0, %v1824
          %v1826 = vpop.f32.mrb[0].mxu0
          %v1827 = vpop.f32.mrb[0].mxu0
          %v1828 = vadd.f32 0.0, %v1827
          %v1829 = vpop.f32.mrb[0].mxu0
          %1830 = vmatprep.mubr.bf16.mxu0 0
          %1831 = vmatmul.mubr.bf16.gmra.mrb[0].mxu0 %v1597
          %v1832 = vpop.f32.mrb[0].mxu0
          %v1833 = vadd.f32 0.0, %v1832
          %v1834 = vpop.f32.mrb[0].mxu0
          %v1835 = vpop.f32.mrb[0].mxu0
          %v1836 = vadd.f32 0.0, %v1835
          %v1837 = vpop.f32.mrb[0].mxu0
          %1838 = vmatprep.mubr.bf16.mxu0 0
          %1839 = vmatmul.mubr.bf16.gmra.mrb[0].mxu0 %v1598
          %v1840 = vpop.f32.mrb[0].mxu0
          %v1841 = vadd.f32 0.0, %v1840
          %v1842 = vpop.f32.mrb[0].mxu0
          %v1843 = vpop.f32.mrb[0].mxu0
          %v1844 = vadd.f32 0.0, %v1843
          %v1845 = vpop.f32.mrb[0].mxu0
          %1846 = vmatprep.mubr.bf16.mxu0 0
          %1847 = vmatmul.mubr.bf16.gmra.mrb[0].mxu0 %v1599
          %v1848 = vpop.f32.mrb[0].mxu0
          %v1849 = vadd.f32 0.0, %v1848
          %v1850 = vpop.f32.mrb[0].mxu0
          %v1851 = vpop.f32.mrb[0].mxu0
          %v1852 = vadd.f32 0.0, %v1851
          %v1853 = vpop.f32.mrb[0].mxu0
          %1854 = vmatprep.mubr.bf16.mxu0 0
          %1855 = vmatmul.mubr.bf16.gmra.mrb[0].mxu0 %v1600
          %v1856 = vpop.f32.mrb[0].mxu0
          %v1857 = vadd.f32 0.0, %v1856
          %v1858 = vpop.f32.mrb[0].mxu0
          %v1859 = vpop.f32.mrb[0].mxu0
          %v1860 = vadd.f32 0.0, %v1859
          %v1861 = vpop.f32.mrb[0].mxu0
          %1862 = vmatprep.mubr.bf16.mxu0 0
          %1863 = vmatmul.mubr.bf16.gmra.mrb[0].mxu0 %v1601
          %v1864 = vpop.f32.mrb[0].mxu0
          %v1865 = vadd.f32 0.0, %v1864
          %v1866 = vpop.f32.mrb[0].mxu0
          %v1867 = vpop.f32.mrb[0].mxu0
          %v1868 = vadd.f32 0.0, %v1867
          %v1869 = vpop.f32.mrb[0].mxu0
          %1870 = vmatprep.mubr.bf16.mxu0 0
          %1871 = vmatmul.mubr.bf16.gmra.mrb[0].mxu0 %v1602
          %v1872 = vpop.f32.mrb[0].mxu0
          %v1873 = vadd.f32 0.0, %v1872
          %v1874 = vpop.f32.mrb[0].mxu0
          %v1875 = vpop.f32.mrb[0].mxu0
          %v1876 = vadd.f32 0.0, %v1875
          %v1877 = vpop.f32.mrb[0].mxu0
          %1878 = vmatprep.mubr.bf16.mxu0 0
          %1879 = vmatmul.mubr.bf16.gmra.mrb[0].mxu0 %v1603
          %v1880 = vpop.f32.mrb[0].mxu0
          %v1881 = vadd.f32 0.0, %v1880
          %v1882 = vpop.f32.mrb[0].mxu0
          %v1883 = vpop.f32.mrb[0].mxu0
          %v1884 = vadd.f32 0.0, %v1883
          %v1885 = vpop.f32.mrb[0].mxu0
          %1886 = vmatprep.mubr.bf16.mxu0 0
          %1887 = vmatmul.mubr.bf16.gmra.mrb[0].mxu0 %v1604
          %v1888 = vpop.f32.mrb[0].mxu0
          %v1889 = vadd.f32 0.0, %v1888
          %v1890 = vpop.f32.mrb[0].mxu0
          %v1891 = vpop.f32.mrb[0].mxu0
          %v1892 = vadd.f32 0.0, %v1891
          %v1893 = vpop.f32.mrb[0].mxu0
          %1894 = vmatprep.mubr.bf16.mxu0 0
          %1895 = vmatmul.mubr.bf16.gmra.mrb[0].mxu0 %v1605
          %v1896 = vpop.f32.mrb[0].mxu0
          %v1897 = vadd.f32 0.0, %v1896
          %v1898 = vpop.f32.mrb[0].mxu0
          %v1899 = vpop.f32.mrb[0].mxu0
          %v1900 = vadd.f32 0.0, %v1899
          %v1901 = vpop.f32.mrb[0].mxu0
          %1902 = vmatprep.mubr.bf16.mxu0 0
          %1903 = vmatmul.mubr.bf16.gmra.mrb[0].mxu0 %v1606
          %v1904 = vpop.f32.mrb[0].mxu0
          %v1905 = vadd.f32 0.0, %v1904
          %v1906 = vpop.f32.mrb[0].mxu0
          %v1907 = vpop.f32.mrb[0].mxu0
          %v1908 = vadd.f32 0.0, %v1907
          %v1909 = vpop.f32.mrb[0].mxu0
          %1910 = vmatprep.mubr.bf16.mxu0 0
          %1911 = vmatmul.mubr.bf16.gmra.mrb[0].mxu0 %v1607
          %v1912 = vpop.f32.mrb[0].mxu0
          %v1913 = vadd.f32 0.0, %v1912
          %v1914 = vpop.f32.mrb[0].mxu0
          %v1915 = vpop.f32.mrb[0].mxu0
          %v1916 = vadd.f32 0.0, %v1915
          %v1917 = vpop.f32.mrb[0].mxu0
          %1918 = vmatprep.mubr.bf16.mxu0 0
          %1919 = vmatmul.mubr.bf16.gmra.mrb[0].mxu0 %v1608
          %v1920 = vpop.f32.mrb[0].mxu0
          %v1921 = vadd.f32 0.0, %v1920
          %v1922 = vpop.f32.mrb[0].mxu0
          %v1923 = vpop.f32.mrb[0].mxu0
          %v1924 = vadd.f32 0.0, %v1923
          %v1925 = vpop.f32.mrb[0].mxu0
          %1926 = vmatprep.mubr.bf16.mxu0 0
          %1927 = vmatmul.mubr.bf16.gmra.mrb[0].mxu0 %v1609
          %v1928 = vpop.f32.mrb[0].mxu0
          %v1929 = vadd.f32 0.0, %v1928
          %v1930 = vpop.f32.mrb[0].mxu0
          %v1931 = vpop.f32.mrb[0].mxu0
          %v1932 = vadd.f32 0.0, %v1931
          %v1933 = vpop.f32.mrb[0].mxu0
          %1934 = vmatprep.mubr.bf16.mxu0 0
          %1935 = vmatmul.mubr.bf16.gmra.mrb[0].mxu0 %v1610
          %v1936 = vpop.f32.mrb[0].mxu0
          %v1937 = vadd.f32 0.0, %v1936
          %v1938 = vpop.f32.mrb[0].mxu0
          %v1939 = vpop.f32.mrb[0].mxu0
          %v1940 = vadd.f32 0.0, %v1939
          %v1941 = vpop.f32.mrb[0].mxu0
          %1942 = vmatprep.mubr.bf16.mxu0 0
          %1943 = vmatmul.mubr.bf16.gmra.mrb[0].mxu0 %v1611
          %v1944 = vpop.f32.mrb[0].mxu0
          %v1945 = vadd.f32 0.0, %v1944
          %v1946 = vpop.f32.mrb[0].mxu0
          %v1947 = vpop.f32.mrb[0].mxu0
          %v1948 = vadd.f32 0.0, %v1947
          %v1949 = vpop.f32.mrb[0].mxu0
          %1950 = vmatprep.mubr.bf16.mxu0 0
          %1951 = vmatmul.mubr.bf16.gmra.mrb[0].mxu0 %v1612
          %v1952 = vpop.f32.mrb[0].mxu0
          %v1953 = vadd.f32 0.0, %v1952
          %v1954 = vpop.f32.mrb[0].mxu0
          %v1955 = vpop.f32.mrb[0].mxu0
          %v1956 = vadd.f32 0.0, %v1955
          %v1957 = vpop.f32.mrb[0].mxu0
          %1958 = vmatprep.mubr.bf16.mxu0 0
          %1959 = vmatmul.mubr.bf16.gmra.mrb[0].mxu0 %v1613
          %v1960 = vpop.f32.mrb[0].mxu0
          %v1961 = vadd.f32 0.0, %v1960
          %v1962 = vpop.f32.mrb[0].mxu0
          %v1963 = vpop.f32.mrb[0].mxu0
          %v1964 = vadd.f32 0.0, %v1963
          %v1965 = vpop.f32.mrb[0].mxu0
          %1966 = vdwg.mxu0
          %v1967 = vpack.c.bf16 %v1716, %v1713
          %v1968 = vpack.c.bf16 %v1724, %v1721
          %v1969 = vpack.c.bf16 %v1732, %v1729
          %v1970 = vpack.c.bf16 %v1740, %v1737
          %v1971 = vpack.c.bf16 %v1748, %v1745
          %v1972 = vpack.c.bf16 %v1756, %v1753
          %v1973 = vpack.c.bf16 %v1764, %v1761
          %v1974 = vpack.c.bf16 %v1772, %v1769
          %v1975 = vpack.c.bf16 %v1780, %v1777
          %v1976 = vpack.c.bf16 %v1788, %v1785
          %v1977 = vpack.c.bf16 %v1796, %v1793
          %v1978 = vpack.c.bf16 %v1804, %v1801
          %v1979 = vpack.c.bf16 %v1812, %v1809
          %v1980 = vpack.c.bf16 %v1820, %v1817
          %v1981 = vpack.c.bf16 %v1828, %v1825
          %v1982 = vpack.c.bf16 %v1836, %v1833
          %v1983 = vpack.c.bf16 %v1844, %v1841
          %v1984 = vpack.c.bf16 %v1852, %v1849
          %v1985 = vpack.c.bf16 %v1860, %v1857
          %v1986 = vpack.c.bf16 %v1868, %v1865
          %v1987 = vpack.c.bf16 %v1876, %v1873
          %v1988 = vpack.c.bf16 %v1884, %v1881
          %v1989 = vpack.c.bf16 %v1892, %v1889
          %v1990 = vpack.c.bf16 %v1900, %v1897
          %v1991 = vpack.c.bf16 %v1908, %v1905
          %v1992 = vpack.c.bf16 %v1916, %v1913
          %v1993 = vpack.c.bf16 %v1924, %v1921
          %v1994 = vpack.c.bf16 %v1932, %v1929
          %v1995 = vpack.c.bf16 %v1940, %v1937
          %v1996 = vpack.c.bf16 %v1948, %v1945
          %v1997 = vpack.c.bf16 %v1956, %v1953
          %v1998 = vpack.c.bf16 %v1964, %v1961
          %v2031 = vunpack.c.l.b16 %v1967
          %v2032 = vunpack.c.h.b16 %v1967
          %v2033 = vunpack.c.l.b16 %v1968
          %v2034 = vunpack.c.h.b16 %v1968
          %v2035 = vunpack.c.l.b16 %v1969
          %v2036 = vunpack.c.h.b16 %v1969
          %v2037 = vunpack.c.l.b16 %v1970
          %v2038 = vunpack.c.h.b16 %v1970
          %v2039 = vunpack.c.l.b16 %v1971
          %v2040 = vunpack.c.h.b16 %v1971
          %v2041 = vunpack.c.l.b16 %v1972
          %v2042 = vunpack.c.h.b16 %v1972
          %v2043 = vunpack.c.l.b16 %v1973
          %v2044 = vunpack.c.h.b16 %v1973
          %v2045 = vunpack.c.l.b16 %v1974
          %v2046 = vunpack.c.h.b16 %v1974
          %v2047 = vunpack.c.l.b16 %v1975
          %v2048 = vunpack.c.h.b16 %v1975
          %v2049 = vunpack.c.l.b16 %v1976
          %v2050 = vunpack.c.h.b16 %v1976
          %v2051 = vunpack.c.l.b16 %v1977
          %v2052 = vunpack.c.h.b16 %v1977
          %v2053 = vunpack.c.l.b16 %v1978
          %v2054 = vunpack.c.h.b16 %v1978
          %v2055 = vunpack.c.l.b16 %v1979
          %v2056 = vunpack.c.h.b16 %v1979
          %v2057 = vunpack.c.l.b16 %v1980
          %v2058 = vunpack.c.h.b16 %v1980
          %v2059 = vunpack.c.l.b16 %v1981
          %v2060 = vunpack.c.h.b16 %v1981
          %v2061 = vunpack.c.l.b16 %v1982
          %v2062 = vunpack.c.h.b16 %v1982
          %v2063 = vunpack.c.l.b16 %v1983
          %v2064 = vunpack.c.h.b16 %v1983
          %v2065 = vunpack.c.l.b16 %v1984
          %v2066 = vunpack.c.h.b16 %v1984
          %v2067 = vunpack.c.l.b16 %v1985
          %v2068 = vunpack.c.h.b16 %v1985
          %v2069 = vunpack.c.l.b16 %v1986
          %v2070 = vunpack.c.h.b16 %v1986
          %v2071 = vunpack.c.l.b16 %v1987
          %v2072 = vunpack.c.h.b16 %v1987
          %v2073 = vunpack.c.l.b16 %v1988
          %v2074 = vunpack.c.h.b16 %v1988
          %v2075 = vunpack.c.l.b16 %v1989
          %v2076 = vunpack.c.h.b16 %v1989
          %v2077 = vunpack.c.l.b16 %v1990
          %v2078 = vunpack.c.h.b16 %v1990
          %v2079 = vunpack.c.l.b16 %v1991
          %v2080 = vunpack.c.h.b16 %v1991
          %v2081 = vunpack.c.l.b16 %v1992
          %v2082 = vunpack.c.h.b16 %v1992
          %v2083 = vunpack.c.l.b16 %v1993
          %v2084 = vunpack.c.h.b16 %v1993
          %v2085 = vunpack.c.l.b16 %v1994
          %v2086 = vunpack.c.h.b16 %v1994
          %v2087 = vunpack.c.l.b16 %v1995
          %v2088 = vunpack.c.h.b16 %v1995
          %v2089 = vunpack.c.l.b16 %v1996
          %v2090 = vunpack.c.h.b16 %v1996
          %v2091 = vunpack.c.l.b16 %v1997
          %v2092 = vunpack.c.h.b16 %v1997
          %v2093 = vunpack.c.l.b16 %v1998
          %v2094 = vunpack.c.h.b16 %v1998
          %v2095 = vpack.c.b16 %v2031, %v2031
          %v2096 = vpack.c.b16 %v2032, %v2032
          %v2097 = vpack.c.b16 %v2033, %v2033
          %v2098 = vpack.c.b16 %v2034, %v2034
          %v2099 = vpack.c.b16 %v2035, %v2035
          %v2100 = vpack.c.b16 %v2036, %v2036
          %v2101 = vpack.c.b16 %v2037, %v2037
          %v2102 = vpack.c.b16 %v2038, %v2038
          %v2103 = vpack.c.b16 %v2039, %v2039
          %v2104 = vpack.c.b16 %v2040, %v2040
          %v2105 = vpack.c.b16 %v2041, %v2041
          %v2106 = vpack.c.b16 %v2042, %v2042
          %v2107 = vpack.c.b16 %v2043, %v2043
          %v2108 = vpack.c.b16 %v2044, %v2044
          %v2109 = vpack.c.b16 %v2045, %v2045
          %v2110 = vpack.c.b16 %v2046, %v2046
          %v2111 = vpack.c.b16 %v2047, %v2047
          %v2112 = vpack.c.b16 %v2048, %v2048
          %v2113 = vpack.c.b16 %v2049, %v2049
          %v2114 = vpack.c.b16 %v2050, %v2050
          %v2115 = vpack.c.b16 %v2051, %v2051
          %v2116 = vpack.c.b16 %v2052, %v2052
          %v2117 = vpack.c.b16 %v2053, %v2053
          %v2118 = vpack.c.b16 %v2054, %v2054
          %v2119 = vpack.c.b16 %v2055, %v2055
          %v2120 = vpack.c.b16 %v2056, %v2056
          %v2121 = vpack.c.b16 %v2057, %v2057
          %v2122 = vpack.c.b16 %v2058, %v2058
          %v2123 = vpack.c.b16 %v2059, %v2059
          %v2124 = vpack.c.b16 %v2060, %v2060
          %v2125 = vpack.c.b16 %v2061, %v2061
          %v2126 = vpack.c.b16 %v2062, %v2062
          %v2127 = vpack.c.b16 %v2063, %v2063
          %v2128 = vpack.c.b16 %v2064, %v2064
          %v2129 = vpack.c.b16 %v2065, %v2065
          %v2130 = vpack.c.b16 %v2066, %v2066
          %v2131 = vpack.c.b16 %v2067, %v2067
          %v2132 = vpack.c.b16 %v2068, %v2068
          %v2133 = vpack.c.b16 %v2069, %v2069
          %v2134 = vpack.c.b16 %v2070, %v2070
          %v2135 = vpack.c.b16 %v2071, %v2071
          %v2136 = vpack.c.b16 %v2072, %v2072
          %v2137 = vpack.c.b16 %v2073, %v2073
          %v2138 = vpack.c.b16 %v2074, %v2074
          %v2139 = vpack.c.b16 %v2075, %v2075
          %v2140 = vpack.c.b16 %v2076, %v2076
          %v2141 = vpack.c.b16 %v2077, %v2077
          %v2142 = vpack.c.b16 %v2078, %v2078
          %v2143 = vpack.c.b16 %v2079, %v2079
          %v2144 = vpack.c.b16 %v2080, %v2080
          %v2145 = vpack.c.b16 %v2081, %v2081
          %v2146 = vpack.c.b16 %v2082, %v2082
          %v2147 = vpack.c.b16 %v2083, %v2083
          %v2148 = vpack.c.b16 %v2084, %v2084
          %v2149 = vpack.c.b16 %v2085, %v2085
          %v2150 = vpack.c.b16 %v2086, %v2086
          %v2151 = vpack.c.b16 %v2087, %v2087
          %v2152 = vpack.c.b16 %v2088, %v2088
          %v2153 = vpack.c.b16 %v2089, %v2089
          %v2154 = vpack.c.b16 %v2090, %v2090
          %v2155 = vpack.c.b16 %v2091, %v2091
          %v2156 = vpack.c.b16 %v2092, %v2092
          %v2157 = vpack.c.b16 %v2093, %v2093
          %v2158 = vpack.c.b16 %v2094, %v2094
          %2223 = vst [vmem:[#allocation12] sm:$0xf] %v2095
          %2224 = vst [vmem:[#allocation12 + $0x4] sm:$0xf] %v2096
          %2225 = vst [vmem:[#allocation12 + $0x8] sm:$0xf] %v2097
          %2226 = vst [vmem:[#allocation12 + $0xc] sm:$0xf] %v2098
          %2227 = vst [vmem:[#allocation12 + $0x10] sm:$0xf] %v2099
          %2228 = vst [vmem:[#allocation12 + $0x14] sm:$0xf] %v2100
          %2229 = vst [vmem:[#allocation12 + $0x18] sm:$0xf] %v2101
          %2230 = vst [vmem:[#allocation12 + $0x1c] sm:$0xf] %v2102
          %2231 = vst [vmem:[#allocation12 + $0x20] sm:$0xf] %v2103
          %2232 = vst [vmem:[#allocation12 + $0x24] sm:$0xf] %v2104
          %2233 = vst [vmem:[#allocation12 + $0x28] sm:$0xf] %v2105
          %2234 = vst [vmem:[#allocation12 + $0x2c] sm:$0xf] %v2106
          %2235 = vst [vmem:[#allocation12 + $0x30] sm:$0xf] %v2107
          %2236 = vst [vmem:[#allocation12 + $0x34] sm:$0xf] %v2108
          %2237 = vst [vmem:[#allocation12 + $0x38] sm:$0xf] %v2109
          %2238 = vst [vmem:[#allocation12 + $0x3c] sm:$0xf] %v2110
          %2239 = vst [vmem:[#allocation12 + $0x40] sm:$0xf] %v2111
          %2240 = vst [vmem:[#allocation12 + $0x44] sm:$0xf] %v2112
          %2241 = vst [vmem:[#allocation12 + $0x48] sm:$0xf] %v2113
          %2242 = vst [vmem:[#allocation12 + $0x4c] sm:$0xf] %v2114
          %2243 = vst [vmem:[#allocation12 + $0x50] sm:$0xf] %v2115
          %2244 = vst [vmem:[#allocation12 + $0x54] sm:$0xf] %v2116
          %2245 = vst [vmem:[#allocation12 + $0x58] sm:$0xf] %v2117
          %2246 = vst [vmem:[#allocation12 + $0x5c] sm:$0xf] %v2118
          %2247 = vst [vmem:[#allocation12 + $0x60] sm:$0xf] %v2119
          %2248 = vst [vmem:[#allocation12 + $0x64] sm:$0xf] %v2120
          %2249 = vst [vmem:[#allocation12 + $0x68] sm:$0xf] %v2121
          %2250 = vst [vmem:[#allocation12 + $0x6c] sm:$0xf] %v2122
          %2251 = vst [vmem:[#allocation12 + $0x70] sm:$0xf] %v2123
          %2252 = vst [vmem:[#allocation12 + $0x74] sm:$0xf] %v2124
          %2253 = vst [vmem:[#allocation12 + $0x78] sm:$0xf] %v2125
          %2254 = vst [vmem:[#allocation12 + $0x7c] sm:$0xf] %v2126
          %2255 = vst [vmem:[#allocation12 + $0x80] sm:$0xf] %v2127
          %2256 = vst [vmem:[#allocation12 + $0x84] sm:$0xf] %v2128
          %2257 = vst [vmem:[#allocation12 + $0x88] sm:$0xf] %v2129
          %2258 = vst [vmem:[#allocation12 + $0x8c] sm:$0xf] %v2130
          %2259 = vst [vmem:[#allocation12 + $0x90] sm:$0xf] %v2131
          %2260 = vst [vmem:[#allocation12 + $0x94] sm:$0xf] %v2132
          %2261 = vst [vmem:[#allocation12 + $0x98] sm:$0xf] %v2133
          %2262 = vst [vmem:[#allocation12 + $0x9c] sm:$0xf] %v2134
          %2263 = vst [vmem:[#allocation12 + $0xa0] sm:$0xf] %v2135
          %2264 = vst [vmem:[#allocation12 + $0xa4] sm:$0xf] %v2136
          %2265 = vst [vmem:[#allocation12 + $0xa8] sm:$0xf] %v2137
          %2266 = vst [vmem:[#allocation12 + $0xac] sm:$0xf] %v2138
          %2267 = vst [vmem:[#allocation12 + $0xb0] sm:$0xf] %v2139
          %2268 = vst [vmem:[#allocation12 + $0xb4] sm:$0xf] %v2140
          %2269 = vst [vmem:[#allocation12 + $0xb8] sm:$0xf] %v2141
          %2270 = vst [vmem:[#allocation12 + $0xbc] sm:$0xf] %v2142
          %2271 = vst [vmem:[#allocation12 + $0xc0] sm:$0xf] %v2143
          %2272 = vst [vmem:[#allocation12 + $0xc4] sm:$0xf] %v2144
          %2273 = vst [vmem:[#allocation12 + $0xc8] sm:$0xf] %v2145
          %2274 = vst [vmem:[#allocation12 + $0xcc] sm:$0xf] %v2146
          %2275 = vst [vmem:[#allocation12 + $0xd0] sm:$0xf] %v2147
          %2276 = vst [vmem:[#allocation12 + $0xd4] sm:$0xf] %v2148
          %2277 = vst [vmem:[#allocation12 + $0xd8] sm:$0xf] %v2149
          %2278 = vst [vmem:[#allocation12 + $0xdc] sm:$0xf] %v2150
          %2279 = vst [vmem:[#allocation12 + $0xe0] sm:$0xf] %v2151
          %2280 = vst [vmem:[#allocation12 + $0xe4] sm:$0xf] %v2152
          %2281 = vst [vmem:[#allocation12 + $0xe8] sm:$0xf] %v2153
          %2282 = vst [vmem:[#allocation12 + $0xec] sm:$0xf] %v2154
          %2283 = vst [vmem:[#allocation12 + $0xf0] sm:$0xf] %v2155
          %2284 = vst [vmem:[#allocation12 + $0xf4] sm:$0xf] %v2156
          %2285 = vst [vmem:[#allocation12 + $0xf8] sm:$0xf] %v2157
          %2286 = vst [vmem:[#allocation12 + $0xfc] sm:$0xf] %v2158
        $region60: #{tpu_custom_call.1} parent=35 // pred_fallthru
          _
        // Predicated region
        $region61: #{tpu_custom_call.1} parent=35 // pred_check
          %p2287 = pneg %p166
        $region62: #{tpu_custom_call.1} parent=35 // pred_check_branch
          %2289 = sbr.rel (%p2287) target = $region64
        $region63: #{tpu_custom_call.1} parent=35 // pred_region
          %s2290 = smul.u32 64, %s33
          %s2292 = ssub.s32 4096, 4096
          %2293 = vsyncadd [#allocation8], %s2292
          %s2294 = smul.addr %s2290, 64
          %s2295 = scalar_lea.hbm %s6, %s2294
          %s2296 = sshll.u32 [#allocation12], 4
          %s2297 = int_to_ptr.vmem [resolvable:$true] %s2296
          %2302 = dma.vmem_to_hbm [thread:$0]  %s2297, 4096, %s2295, [#allocation8], 64, 64, 4
        $region64: #{tpu_custom_call.1} parent=35 // pred_fallthru
          _
        // Predicated region
        $region65: #{tpu_custom_call.1} parent=35 // pred_check
          %p2303 = pneg %p166
        $region66: #{tpu_custom_call.1} parent=35 // pred_check_branch
          %2305 = sbr.rel (%p2303) target = $region68
        $region67: #{tpu_custom_call.1} parent=35 // pred_region
          %2306 = dma.done [#allocation8], 4096
        $region68: #{tpu_custom_call.1} parent=35 // pred_fallthru
          _
      $region36: #{tpu_custom_call.1} parent=5 // pred_fallthru
        _
      %p2307 = scmp.le.s32.totalorder 2, %s24
      // Predicated region
      $region69: #{tpu_custom_call.1} parent=5 // pred_check
        %p2308 = pneg %p2307
      $region70: #{tpu_custom_call.1} parent=5 // pred_check_branch
        %2310 = sbr.rel (%p2308) target = $region72
      $region71: #{tpu_custom_call.1} parent=5 // pred_region
        %s2311 = ssub.s32 %s24, 2
      $region72: #{tpu_custom_call.1} parent=5 // pred_fallthru
        _
    $region6: #{tpu_custom_call.1} parent=1 // loop_footer
      %s28 = sadd.s32 1, %s24
    $region7: #{tpu_custom_call.1} parent=1 // loop_footer_branch
      %23 = sbr.rel target = $region3
    $region8: #{tpu_custom_call.1} parent=1 // loop_exit
      _
    %2312 = vsyncpa [#allocation7], 1
    %s2313 = scalar_lea.sflag [#allocation7], 1
    %2314 = vsyncpa %s2313, 1
    %2315 = vsyncpa [#allocation10], 1
    %2316 = vsyncpa [#allocation8], 1
    %s2317 = scalar_lea.sflag [#allocation8], 1
    %2318 = vsyncpa %s2317, 1

</llo_original>
